<compile_context>
chip_gen: v7x
topology: tpu7x:2x2x1
jax: 0.10.0
libtpu: 0.0.40
codegen_flags: <defaults>
</compile_context>

<pallas_src>
import numpy as np
import jax
import jax.numpy as jnp
from jax.experimental import pallas as pl
from jax.experimental.pallas import tpu as pltpu

# -----------------------------------------------------------------------------
# near_sym_a biorthogonal (5,7)-tap level-1 analysis filters, written as integer
# taps * rational scale so the folded filter/pad/decimation matrices below have
# exact integer entries (|entry| <= 256 -> exactly representable in bf16).
# -----------------------------------------------------------------------------
_H0_INT = np.array([-1.0, 5.0, 12.0, 5.0, -1.0], dtype=np.float64)
_H0_SCALE = 1.0 / 20.0
_H1_INT = np.array([-3.0, 15.0, 73.0, -170.0, 73.0, 15.0, -3.0], dtype=np.float64)
_H1_SCALE = 1.0 / 280.0
_H0O = _H0_INT * _H0_SCALE          # [-0.05, 0.25, 0.6, 0.25, -0.05]
_H1O = _H1_INT * _H1_SCALE
MAGBIAS = 0.01


def _sym_idx(t, n):
    """'symmetric' (half-sample) padding index map."""
    if t < 0:
        return -t - 1
    if t >= n:
        return 2 * n - 1 - t
    return t


def _fold_row_matrix(h_int, H):
    """(2*H2, H): symmetric pad + filter along H + even/odd row decimation.

    Applied from the left; rows 0..H2-1 are the even filtered rows, H2.. the odd.
    """
    L = len(h_int)
    m = L // 2
    H2 = H // 2
    A = np.zeros((2 * H2, H), np.float64)
    for r in range(2 * H2):
        i = 2 * r if r < H2 else 2 * (r - H2) + 1
        for k in range(L):
            A[r, _sym_idx(i + k - m, H)] += h_int[k]
    assert np.all(A == np.round(A)) and np.max(np.abs(A)) <= 256  # exact in bf16
    return A


def _fold_col_matrix(h_int, W):
    """(W, 2*W2): symmetric pad + filter along W + even/odd column decimation.

    Applied from the right; cols 0..W2-1 are the even filtered cols, W2.. the odd.
    """
    L = len(h_int)
    m = L // 2
    W2 = W // 2
    B = np.zeros((W, 2 * W2), np.float64)
    for j in range(2 * W2):
        jj = 2 * j if j < W2 else 2 * (j - W2) + 1
        for k in range(L):
            B[_sym_idx(jj + k - m, W), j] += h_int[k]
    assert np.all(B == np.round(B)) and np.max(np.abs(B)) <= 256  # exact in bf16
    return B


# -----------------------------------------------------------------------------
# Pallas kernel (one batch element, one block of Cb channels per grid step)
# -----------------------------------------------------------------------------
def _make_kernel(Cb, H, W, magbias):
    H2, W2 = H // 2, W // 2
    s0, s1 = _H0_SCALE, _H1_SCALE
    # Per-subband compile-time scales.  The q2c 1/sqrt(2) appears exactly once per
    # bandpass subband here (this fixes the previous hh double-scaling bug).
    k_ll = np.float32(0.25 * s0 * s0)            # avg_pool2d(ll, 2)
    k_lh = np.float32(0.5 * (s0 * s1) ** 2)      # lh / hl magnitude (incl. 1/sqrt2)
    k_hh = np.float32(0.5 * (s1 * s1) ** 2)      # hh magnitude (incl. 1/sqrt2)
    bias = np.float32(magbias)
    bias2 = np.float32(magbias * magbias)

    def split_hi_lo(v):
        hi = v.astype(jnp.bfloat16)
        lo = (v - hi.astype(jnp.float32)).astype(jnp.bfloat16)
        return hi, lo

    def kernel(a_ref, b_ref, x_ref, o_ref):
        A = a_ref[...]               # (4*H2, H) bf16, exact integers: [h0 ; h1]
        B = b_ref[...]               # (W, 4*W2) bf16, exact integers: [h0 | h1]
        x = x_ref[0]                 # (Cb, H, W) f32 (unpadded; pad folded into A/B)

        # ---- W direction: pad+filter+decimate, all Cb channels in ONE matmul ----
        xf = x.reshape(Cb * H, W)
        x_hi, x_lo = split_hi_lo(xf)
        Y = (jnp.dot(x_hi, B, preferred_element_type=jnp.float32) +
             jnp.dot(x_lo, B, preferred_element_type=jnp.float32))   # (Cb*H, 4*W2)
        y_hi, y_lo = split_hi_lo(Y)
        y_hi = y_hi.reshape(Cb, H, 4 * W2)
        y_lo = y_lo.reshape(Cb, H, 4 * W2)

        def mag(u, v, k):
            return jnp.sqrt(k * (u * u + v * v) + bias2) - bias

        for c in range(Cb):          # static, unrolled channel loop (Cb <= 16)
            # ---- H direction: one (4*H2, H) @ (H, 4*W2) matmul per channel ----
            Z = (jnp.dot(A, y_hi[c], preferred_element_type=jnp.float32) +
                 jnp.dot(A, y_lo[c], preferred_element_type=jnp.float32))  # (4H2,4W2)

            def quads(r0, c0):
                a = Z[r0:r0 + H2, c0:c0 + W2]                    # even rows, even cols
                b = Z[r0:r0 + H2, c0 + W2:c0 + 2 * W2]           # even rows, odd  cols
                cc = Z[r0 + H2:r0 + 2 * H2, c0:c0 + W2]          # odd  rows, even cols
                d = Z[r0 + H2:r0 + 2 * H2, c0 + W2:c0 + 2 * W2]  # odd  rows, odd  cols
                return a, b, cc, d

            # lowpass (h0 along H, h0 along W): 2x2 average pool
            a, b, cc, d = quads(0, 0)
            o_ref[0, 0, c] = k_ll * ((a + b) + (cc + d))
            # lh -> 15 / 165 degrees (h1 along H, h0 along W)
            a, b, cc, d = quads(2 * H2, 0)
            o_ref[0, 1, c] = mag(a - d, b + cc, k_lh)
            o_ref[0, 6, c] = mag(a + d, b - cc, k_lh)
            # hh -> 45 / 135 degrees (h1 along H, h1 along W)
            a, b, cc, d = quads(2 * H2, 2 * W2)
            o_ref[0, 2, c] = mag(a - d, b + cc, k_hh)
            o_ref[0, 5, c] = mag(a + d, b - cc, k_hh)
            # hl -> 75 / 105 degrees (h0 along H, h1 along W)
            a, b, cc, d = quads(0, 2 * W2)
            o_ref[0, 3, c] = mag(a - d, b + cc, k_lh)
            o_ref[0, 4, c] = mag(a + d, b - cc, k_lh)

    return kernel


def _pick_channel_block(C, H, W, budget_bytes=32 * 1024 * 1024, max_cb=16):
    # Rough per-channel VMEM footprint: double-buffered input (2*H*W*4) + double-
    # buffered output (2*7*H2*W2*4) + bf16 hi/lo splits + f32 Y  ~= 44*H*W bytes.
    # Budgeted against a 64 MiB vmem_limit so the same choice is safe on v7x.
    per_c = 44 * H * W
    best = 1
    for d in range(1, min(C, max_cb) + 1):
        if C % d == 0 and d * per_c <= budget_bytes:
            best = d
    # TODO(synk): if even Cb=1 exceeds the budget (very large H*W), spatial tiling
    # of the (H, W) plane would be needed; not implemented.
    return best


# -----------------------------------------------------------------------------
# ScatLayerj1 wrapper: (N, C, H, W) -> (N, 7*C, H/2, W/2)
# -----------------------------------------------------------------------------
def scat_layer_j1(x, magbias=MAGBIAS, channel_block=None):
    # TODO(synk): only biort='near_sym_a', mode='symmetric', combine_colour=False
    # (the module defaults) are implemented.
    x = jnp.asarray(x, jnp.float32)
    if x.shape[2] % 2 != 0:
        x = jnp.concatenate([x, x[:, :, -1:]], axis=2)
    if x.shape[3] % 2 != 0:
        x = jnp.concatenate([x, x[:, :, :, -1:]], axis=3)
    N, C, H, W = x.shape
    H2, W2 = H // 2, W // 2

    Cb = channel_block if channel_block is not None else _pick_channel_block(C, H, W)
    assert C % Cb == 0, (C, Cb)

    # Constant folded pad+filter+decimation matrices (exact integers -> exact bf16).
    A = np.concatenate([_fold_row_matrix(_H0_INT, H),
                        _fold_row_matrix(_H1_INT, H)], axis=0)     # (4*H2, H)
    B = np.concatenate([_fold_col_matrix(_H0_INT, W),
                        _fold_col_matrix(_H1_INT, W)], axis=1)     # (W, 4*W2)
    A = jnp.asarray(A, jnp.bfloat16)
    B = jnp.asarray(B, jnp.bfloat16)

    kernel = _make_kernel(Cb, H, W, magbias)

    out = pl.pallas_call(
        kernel,
        out_shape=jax.ShapeDtypeStruct((N, 7, C, H2, W2), jnp.float32),
        grid=(N, C // Cb),
        in_specs=[
            pl.BlockSpec((4 * H2, H), lambda n, c: (0, 0)),        # A (constant)
            pl.BlockSpec((W, 4 * W2), lambda n, c: (0, 0)),        # B (constant)
            pl.BlockSpec((1, Cb, H, W), lambda n, c: (n, c, 0, 0)),
        ],
        out_specs=pl.BlockSpec((1, 7, Cb, H2, W2), lambda n, c: (n, 0, c, 0, 0)),
        compiler_params=pltpu.CompilerParams(
            dimension_semantics=("parallel", "parallel"),
            vmem_limit_bytes=64 * 1024 * 1024),
    )(A, B, x)

    # (N, 7, C, H2, W2) -> (N, 7*C, H2, W2): contiguous, free reshape.
    # TODO(synk): the output block's last dim is W2 (<128 lanes for small W) ->
    # masked stores; a lane-dense (H2*W2) layout needs an in-kernel relayout and is
    # left out here.
    return out.reshape(N, 7 * C, H2, W2)


# -----------------------------------------------------------------------------
# Full InvariantLayerj1_compress forward:
#   1x1 compress conv (C -> C//2)  ->  ScatLayerj1 (Pallas)  ->  1x1 mixing conv
# -----------------------------------------------------------------------------
def invariant_layer_j1_compress(x, w_compress, b_compress, w_mix, b_mix,
                                magbias=MAGBIAS):
    # TODO(synk): the two 1x1 convolutions are plain channel matmuls left to XLA
    # (einsum); fusing the compress conv into the Pallas kernel would save one HBM
    # pass (mainly relevant on v5e).
    # TODO(synk): the reference ctor forwards `k` into InvariantLayerj1's `alpha`
    # slot (raises ValueError for the defaults); we implement the evidently
    # intended alpha=None / k=1 / stride=2 / biort='near_sym_a' configuration.
    x = jnp.asarray(x, jnp.float32)
    y = jnp.einsum('oc,nchw->nohw', w_compress, x) + b_compress[None, :, None, None]
    z = scat_layer_j1(y, magbias=magbias)
    return jnp.einsum('of,nfhw->nohw', w_mix, z) + b_mix[None, :, None, None]


# -----------------------------------------------------------------------------
# Pure-JAX references (mirror the PyTorch forward) for validation
# -----------------------------------------------------------------------------
def scat_layer_j1_ref(x, h0o=_H0O, h1o=_H1O, magbias=MAGBIAS):
    x = jnp.asarray(x, jnp.float32)
    if x.shape[2] % 2 != 0:
        x = jnp.concatenate([x, x[:, :, -1:]], axis=2)
    if x.shape[3] % 2 != 0:
        x = jnp.concatenate([x, x[:, :, :, -1:]], axis=3)
    N, C, H, W = x.shape
    h0 = jnp.asarray(np.asarray(h0o, np.float32).ravel())
    h1 = jnp.asarray(np.asarray(h1o, np.float32).ravel())

    def rowfilter(v, h):
        m = h.shape[0] // 2
        vp = jnp.pad(v, ((0, 0), (0, 0), (0, 0), (m, m)), mode='symmetric')
        return sum(h[k] * vp[:, :, :, k:k + W] for k in range(h.shape[0]))

    def colfilter(v, h):
        m = h.shape[0] // 2
        vp = jnp.pad(v, ((0, 0), (0, 0), (m, m), (0, 0)), mode='symmetric')
        return sum(h[k] * vp[:, :, k:k + H, :] for k in range(h.shape[0]))

    lo, hi = rowfilter(x, h0), rowfilter(x, h1)
    ll, lh = colfilter(lo, h0), colfilter(lo, h1)
    hl, hh = colfilter(hi, h0), colfilter(hi, h1)

    def q2c(y):
        y = y / np.sqrt(2.0)
        a, b = y[:, :, 0::2, 0::2], y[:, :, 0::2, 1::2]
        c, d = y[:, :, 1::2, 0::2], y[:, :, 1::2, 1::2]
        return (a - d, b + c), (a + d, b - c)

    (r15, i15), (r165, i165) = q2c(lh)
    (r45, i45), (r135, i135) = q2c(hh)
    (r75, i75), (r105, i105) = q2c(hl)
    reals = jnp.stack([r15, r45, r75, r105, r135, r165], axis=1)
    imags = jnp.stack([i15, i45, i75, i105, i135, i165], axis=1)
    r = jnp.sqrt(reals * reals + imags * imags + magbias ** 2) - magbias
    llp = ll.reshape(N, C, H // 2, 2, W // 2, 2).mean(axis=(3, 5))   # avg_pool2d(ll, 2)
    Z = jnp.concatenate([llp[:, None], r], axis=1)
    return Z.reshape(N, 7 * C, H // 2, W // 2)


def invariant_layer_j1_compress_ref(x, w_compress, b_compress, w_mix, b_mix,
                                    magbias=MAGBIAS):
    x = jnp.asarray(x, jnp.float32)
    y = jnp.einsum('oc,nchw->nohw', w_compress, x) + b_compress[None, :, None, None]
    z = scat_layer_j1_ref(y, magbias=magbias)
    return jnp.einsum('of,nfhw->nohw', w_mix, z) + b_mix[None, :, None, None]


if __name__ == "__main__":
    key = jax.random.PRNGKey(0)
    k1, k2, k3, k4, k5 = jax.random.split(key, 5)

    N, C, H, W = 2, 4, 16, 16
    x = jax.random.normal(k1, (N, C, H, W), dtype=jnp.float32)

    # 1) scattering core: Pallas kernel vs pure-JAX reference
    z = jax.block_until_ready(scat_layer_j1(x))
    assert z.shape == (N, 7 * C, H // 2, W // 2), z.shape
    z_ref = scat_layer_j1_ref(x)
    np.testing.assert_allclose(np.asarray(z), np.asarray(z_ref),
                               atol=2e-4, rtol=2e-4)

    # 2) full InvariantLayerj1_compress forward (compress 1x1 -> scat -> mix 1x1)
    C1 = C // 2
    F = 7 * C1
    w_comp = jax.random.normal(k2, (C1, C), dtype=jnp.float32) / np.sqrt(C)
    b_comp = 0.1 * jax.random.normal(k3, (C1,), dtype=jnp.float32)
    w_mix = jax.random.normal(k4, (F, 7 * C1), dtype=jnp.float32) / np.sqrt(7 * C1)
    b_mix = 0.1 * jax.random.normal(k5, (F,), dtype=jnp.float32)

    y = jax.block_until_ready(
        invariant_layer_j1_compress(x, w_comp, b_comp, w_mix, b_mix))
    assert y.shape == (N, F, H // 2, W // 2), y.shape
    y_ref = invariant_layer_j1_compress_ref(x, w_comp, b_comp, w_mix, b_mix)
    np.testing.assert_allclose(np.asarray(y), np.asarray(y_ref),
                               atol=1e-3, rtol=1e-3)

    print("KERNEL_OK")
</pallas_src>

<mosaic_0001>
module attributes {stable_mosaic.version = 11 : i64} {
  func.func @kernel(%arg0: i32, %arg1: i32, %arg2: memref<32x16xbf16, #tpu.memory_space<vmem>>, %arg3: memref<16x32xbf16, #tpu.memory_space<vmem>>, %arg4: memref<1x4x16x16xf32, #tpu.memory_space<vmem>>, %arg5: memref<1x7x4x8x8xf32, #tpu.memory_space<vmem>>) attributes {dimension_semantics = [#tpu.dimension_semantics<parallel>, #tpu.dimension_semantics<parallel>], iteration_bounds = array<i64: 2, 1>, scalar_prefetch = 0 : i64, scratch_operands = 0 : i64, tpu.core_type = #tpu.core_type<tc>, window_params = [{pipeline_mode = #tpu.pipeline_mode<synchronous>, transform_indices = @transform_0, window_bounds = array<i64: 32, 16>}, {pipeline_mode = #tpu.pipeline_mode<synchronous>, transform_indices = @transform_1, window_bounds = array<i64: 16, 32>}, {transform_indices = @transform_2, window_bounds = array<i64: 1, 4, 16, 16>}, {transform_indices = @transform_3, window_bounds = array<i64: 1, 7, 4, 8, 8>}]} {
    %c0 = arith.constant 0 : index
    %c0_0 = arith.constant 0 : index
    %0 = vector.load %arg2[%c0, %c0_0] : memref<32x16xbf16, #tpu.memory_space<vmem>>, vector<32x16xbf16>
    %c0_1 = arith.constant 0 : index
    %c0_2 = arith.constant 0 : index
    %1 = vector.load %arg3[%c0_1, %c0_2] : memref<16x32xbf16, #tpu.memory_space<vmem>>, vector<16x32xbf16>
    %c0_3 = arith.constant 0 : index
    %c0_4 = arith.constant 0 : index
    %c0_5 = arith.constant 0 : index
    %c0_6 = arith.constant 0 : index
    %2 = vector.load %arg4[%c0_3, %c0_4, %c0_5, %c0_6] : memref<1x4x16x16xf32, #tpu.memory_space<vmem>>, vector<1x4x16x16xf32>
    %3 = vector.shape_cast %2 : vector<1x4x16x16xf32> to vector<4x16x16xf32>
    %4 = vector.shape_cast %3 : vector<4x16x16xf32> to vector<64x16xf32>
    %5 = arith.truncf %4 : vector<64x16xf32> to vector<64x16xbf16>
    %6 = arith.extf %5 : vector<64x16xbf16> to vector<64x16xf32>
    %7 = arith.subf %4, %6 : vector<64x16xf32>
    %8 = arith.truncf %7 : vector<64x16xf32> to vector<64x16xbf16>
    %cst = arith.constant dense<0.000000e+00> : vector<64x32xf32>
    %9 = tpu.matmul %5, %1, %cst {dimension_numbers = #tpu.dot_dimension_numbers<[1], [0], [0], [1], [0, 0, 1, 1], [], []>} : vector<64x16xbf16>, vector<16x32xbf16>, vector<64x32xf32> -> vector<64x32xf32>
    %cst_7 = arith.constant dense<0.000000e+00> : vector<64x32xf32>
    %10 = tpu.matmul %8, %1, %cst_7 {dimension_numbers = #tpu.dot_dimension_numbers<[1], [0], [0], [1], [0, 0, 1, 1], [], []>} : vector<64x16xbf16>, vector<16x32xbf16>, vector<64x32xf32> -> vector<64x32xf32>
    %11 = arith.addf %9, %10 : vector<64x32xf32>
    %12 = arith.truncf %11 : vector<64x32xf32> to vector<64x32xbf16>
    %13 = arith.extf %12 : vector<64x32xbf16> to vector<64x32xf32>
    %14 = arith.subf %11, %13 : vector<64x32xf32>
    %15 = arith.truncf %14 : vector<64x32xf32> to vector<64x32xbf16>
    %16 = vector.shape_cast %12 : vector<64x32xbf16> to vector<4x16x32xbf16>
    %17 = vector.shape_cast %15 : vector<64x32xbf16> to vector<4x16x32xbf16>
    %18 = vector.extract_strided_slice %16 {offsets = [0, 0, 0], sizes = [1, 16, 32], strides = [1, 1, 1]} : vector<4x16x32xbf16> to vector<1x16x32xbf16>
    %19 = vector.shape_cast %18 : vector<1x16x32xbf16> to vector<16x32xbf16>
    %cst_8 = arith.constant dense<0.000000e+00> : vector<32x32xf32>
    %20 = tpu.matmul %0, %19, %cst_8 {dimension_numbers = #tpu.dot_dimension_numbers<[1], [0], [0], [1], [0, 0, 1, 1], [], []>} : vector<32x16xbf16>, vector<16x32xbf16>, vector<32x32xf32> -> vector<32x32xf32>
    %21 = vector.extract_strided_slice %17 {offsets = [0, 0, 0], sizes = [1, 16, 32], strides = [1, 1, 1]} : vector<4x16x32xbf16> to vector<1x16x32xbf16>
    %22 = vector.shape_cast %21 : vector<1x16x32xbf16> to vector<16x32xbf16>
    %cst_9 = arith.constant dense<0.000000e+00> : vector<32x32xf32>
    %23 = tpu.matmul %0, %22, %cst_9 {dimension_numbers = #tpu.dot_dimension_numbers<[1], [0], [0], [1], [0, 0, 1, 1], [], []>} : vector<32x16xbf16>, vector<16x32xbf16>, vector<32x32xf32> -> vector<32x32xf32>
    %24 = arith.addf %20, %23 : vector<32x32xf32>
    %25 = vector.extract_strided_slice %24 {offsets = [0, 0], sizes = [8, 8], strides = [1, 1]} : vector<32x32xf32> to vector<8x8xf32>
    %26 = vector.extract_strided_slice %24 {offsets = [0, 8], sizes = [8, 8], strides = [1, 1]} : vector<32x32xf32> to vector<8x8xf32>
    %27 = vector.extract_strided_slice %24 {offsets = [8, 0], sizes = [8, 8], strides = [1, 1]} : vector<32x32xf32> to vector<8x8xf32>
    %28 = vector.extract_strided_slice %24 {offsets = [8, 8], sizes = [8, 8], strides = [1, 1]} : vector<32x32xf32> to vector<8x8xf32>
    %29 = arith.addf %25, %26 : vector<8x8xf32>
    %30 = arith.addf %27, %28 : vector<8x8xf32>
    %31 = arith.addf %29, %30 : vector<8x8xf32>
    %cst_10 = arith.constant 6.250000e-04 : f32
    %32 = vector.broadcast %cst_10 : f32 to vector<8x8xf32>
    %33 = arith.mulf %32, %31 : vector<8x8xf32>
    %c0_11 = arith.constant 0 : index
    %c0_12 = arith.constant 0 : index
    %c0_13 = arith.constant 0 : index
    %c0_14 = arith.constant 0 : index
    %c0_15 = arith.constant 0 : index
    %34 = vector.load %arg5[%c0_11, %c0_12, %c0_13, %c0_14, %c0_15] : memref<1x7x4x8x8xf32, #tpu.memory_space<vmem>>, vector<1x1x1x8x8xf32>
    %35 = vector.shape_cast %34 : vector<1x1x1x8x8xf32> to vector<8x8xf32>
    %36 = vector.shape_cast %33 : vector<8x8xf32> to vector<1x1x1x8x8xf32>
    tpu.vector_store %arg5[%c0_11, %c0_12, %c0_13, %c0_14, %c0_15], %36 {strides = array<i32>} : memref<1x7x4x8x8xf32, #tpu.memory_space<vmem>>, vector<1x1x1x8x8xf32>,
    %37 = vector.extract_strided_slice %24 {offsets = [16, 0], sizes = [8, 8], strides = [1, 1]} : vector<32x32xf32> to vector<8x8xf32>
    %38 = vector.extract_strided_slice %24 {offsets = [16, 8], sizes = [8, 8], strides = [1, 1]} : vector<32x32xf32> to vector<8x8xf32>
    %39 = vector.extract_strided_slice %24 {offsets = [24, 0], sizes = [8, 8], strides = [1, 1]} : vector<32x32xf32> to vector<8x8xf32>
    %40 = vector.extract_strided_slice %24 {offsets = [24, 8], sizes = [8, 8], strides = [1, 1]} : vector<32x32xf32> to vector<8x8xf32>
    %41 = arith.subf %37, %40 : vector<8x8xf32>
    %42 = arith.addf %38, %39 : vector<8x8xf32>
    %43 = arith.mulf %41, %41 : vector<8x8xf32>
    %44 = arith.mulf %42, %42 : vector<8x8xf32>
    %45 = arith.addf %43, %44 : vector<8x8xf32>
    %cst_16 = arith.constant 1.59438773E-8 : f32
    %46 = vector.broadcast %cst_16 : f32 to vector<8x8xf32>
    %47 = arith.mulf %46, %45 : vector<8x8xf32>
    %cst_17 = arith.constant 9.99999974E-5 : f32
    %48 = vector.broadcast %cst_17 : f32 to vector<8x8xf32>
    %49 = arith.addf %47, %48 : vector<8x8xf32>
    %50 = math.sqrt %49 : vector<8x8xf32>
    %cst_18 = arith.constant 0.00999999977 : f32
    %51 = vector.broadcast %cst_18 : f32 to vector<8x8xf32>
    %52 = arith.subf %50, %51 : vector<8x8xf32>
    %c0_19 = arith.constant 0 : index
    %c1 = arith.constant 1 : index
    %c0_20 = arith.constant 0 : index
    %c0_21 = arith.constant 0 : index
    %c0_22 = arith.constant 0 : index
    %53 = vector.load %arg5[%c0_19, %c1, %c0_20, %c0_21, %c0_22] : memref<1x7x4x8x8xf32, #tpu.memory_space<vmem>>, vector<1x1x1x8x8xf32>
    %54 = vector.shape_cast %53 : vector<1x1x1x8x8xf32> to vector<8x8xf32>
    %55 = vector.shape_cast %52 : vector<8x8xf32> to vector<1x1x1x8x8xf32>
    tpu.vector_store %arg5[%c0_19, %c1, %c0_20, %c0_21, %c0_22], %55 {strides = array<i32>} : memref<1x7x4x8x8xf32, #tpu.memory_space<vmem>>, vector<1x1x1x8x8xf32>,
    %56 = arith.addf %37, %40 : vector<8x8xf32>
    %57 = arith.subf %38, %39 : vector<8x8xf32>
    %58 = arith.mulf %56, %56 : vector<8x8xf32>
    %59 = arith.mulf %57, %57 : vector<8x8xf32>
    %60 = arith.addf %58, %59 : vector<8x8xf32>
    %cst_23 = arith.constant 1.59438773E-8 : f32
    %61 = vector.broadcast %cst_23 : f32 to vector<8x8xf32>
    %62 = arith.mulf %61, %60 : vector<8x8xf32>
    %cst_24 = arith.constant 9.99999974E-5 : f32
    %63 = vector.broadcast %cst_24 : f32 to vector<8x8xf32>
    %64 = arith.addf %62, %63 : vector<8x8xf32>
    %65 = math.sqrt %64 : vector<8x8xf32>
    %cst_25 = arith.constant 0.00999999977 : f32
    %66 = vector.broadcast %cst_25 : f32 to vector<8x8xf32>
    %67 = arith.subf %65, %66 : vector<8x8xf32>
    %c0_26 = arith.constant 0 : index
    %c6 = arith.constant 6 : index
    %c0_27 = arith.constant 0 : index
    %c0_28 = arith.constant 0 : index
    %c0_29 = arith.constant 0 : index
    %68 = vector.load %arg5[%c0_26, %c6, %c0_27, %c0_28, %c0_29] : memref<1x7x4x8x8xf32, #tpu.memory_space<vmem>>, vector<1x1x1x8x8xf32>
    %69 = vector.shape_cast %68 : vector<1x1x1x8x8xf32> to vector<8x8xf32>
    %70 = vector.shape_cast %67 : vector<8x8xf32> to vector<1x1x1x8x8xf32>
    tpu.vector_store %arg5[%c0_26, %c6, %c0_27, %c0_28, %c0_29], %70 {strides = array<i32>} : memref<1x7x4x8x8xf32, #tpu.memory_space<vmem>>, vector<1x1x1x8x8xf32>,
    %71 = vector.extract_strided_slice %24 {offsets = [16, 16], sizes = [8, 8], strides = [1, 1]} : vector<32x32xf32> to vector<8x8xf32>
    %72 = vector.extract_strided_slice %24 {offsets = [16, 24], sizes = [8, 8], strides = [1, 1]} : vector<32x32xf32> to vector<8x8xf32>
    %73 = vector.extract_strided_slice %24 {offsets = [24, 16], sizes = [8, 8], strides = [1, 1]} : vector<32x32xf32> to vector<8x8xf32>
    %74 = vector.extract_strided_slice %24 {offsets = [24, 24], sizes = [8, 8], strides = [1, 1]} : vector<32x32xf32> to vector<8x8xf32>
    %75 = arith.subf %71, %74 : vector<8x8xf32>
    %76 = arith.addf %72, %73 : vector<8x8xf32>
    %77 = arith.mulf %75, %75 : vector<8x8xf32>
    %78 = arith.mulf %76, %76 : vector<8x8xf32>
    %79 = arith.addf %77, %78 : vector<8x8xf32>
    %cst_30 = arith.constant 8.13463116E-11 : f32
    %80 = vector.broadcast %cst_30 : f32 to vector<8x8xf32>
    %81 = arith.mulf %80, %79 : vector<8x8xf32>
    %cst_31 = arith.constant 9.99999974E-5 : f32
    %82 = vector.broadcast %cst_31 : f32 to vector<8x8xf32>
    %83 = arith.addf %81, %82 : vector<8x8xf32>
    %84 = math.sqrt %83 : vector<8x8xf32>
    %cst_32 = arith.constant 0.00999999977 : f32
    %85 = vector.broadcast %cst_32 : f32 to vector<8x8xf32>
    %86 = arith.subf %84, %85 : vector<8x8xf32>
    %c0_33 = arith.constant 0 : index
    %c2 = arith.constant 2 : index
    %c0_34 = arith.constant 0 : index
    %c0_35 = arith.constant 0 : index
    %c0_36 = arith.constant 0 : index
    %87 = vector.load %arg5[%c0_33, %c2, %c0_34, %c0_35, %c0_36] : memref<1x7x4x8x8xf32, #tpu.memory_space<vmem>>, vector<1x1x1x8x8xf32>
    %88 = vector.shape_cast %87 : vector<1x1x1x8x8xf32> to vector<8x8xf32>
    %89 = vector.shape_cast %86 : vector<8x8xf32> to vector<1x1x1x8x8xf32>
    tpu.vector_store %arg5[%c0_33, %c2, %c0_34, %c0_35, %c0_36], %89 {strides = array<i32>} : memref<1x7x4x8x8xf32, #tpu.memory_space<vmem>>, vector<1x1x1x8x8xf32>,
    %90 = arith.addf %71, %74 : vector<8x8xf32>
    %91 = arith.subf %72, %73 : vector<8x8xf32>
    %92 = arith.mulf %90, %90 : vector<8x8xf32>
    %93 = arith.mulf %91, %91 : vector<8x8xf32>
    %94 = arith.addf %92, %93 : vector<8x8xf32>
    %cst_37 = arith.constant 8.13463116E-11 : f32
    %95 = vector.broadcast %cst_37 : f32 to vector<8x8xf32>
    %96 = arith.mulf %95, %94 : vector<8x8xf32>
    %cst_38 = arith.constant 9.99999974E-5 : f32
    %97 = vector.broadcast %cst_38 : f32 to vector<8x8xf32>
    %98 = arith.addf %96, %97 : vector<8x8xf32>
    %99 = math.sqrt %98 : vector<8x8xf32>
    %cst_39 = arith.constant 0.00999999977 : f32
    %100 = vector.broadcast %cst_39 : f32 to vector<8x8xf32>
    %101 = arith.subf %99, %100 : vector<8x8xf32>
    %c0_40 = arith.constant 0 : index
    %c5 = arith.constant 5 : index
    %c0_41 = arith.constant 0 : index
    %c0_42 = arith.constant 0 : index
    %c0_43 = arith.constant 0 : index
    %102 = vector.load %arg5[%c0_40, %c5, %c0_41, %c0_42, %c0_43] : memref<1x7x4x8x8xf32, #tpu.memory_space<vmem>>, vector<1x1x1x8x8xf32>
    %103 = vector.shape_cast %102 : vector<1x1x1x8x8xf32> to vector<8x8xf32>
    %104 = vector.shape_cast %101 : vector<8x8xf32> to vector<1x1x1x8x8xf32>
    tpu.vector_store %arg5[%c0_40, %c5, %c0_41, %c0_42, %c0_43], %104 {strides = array<i32>} : memref<1x7x4x8x8xf32, #tpu.memory_space<vmem>>, vector<1x1x1x8x8xf32>,
    %105 = vector.extract_strided_slice %24 {offsets = [0, 16], sizes = [8, 8], strides = [1, 1]} : vector<32x32xf32> to vector<8x8xf32>
    %106 = vector.extract_strided_slice %24 {offsets = [0, 24], sizes = [8, 8], strides = [1, 1]} : vector<32x32xf32> to vector<8x8xf32>
    %107 = vector.extract_strided_slice %24 {offsets = [8, 16], sizes = [8, 8], strides = [1, 1]} : vector<32x32xf32> to vector<8x8xf32>
    %108 = vector.extract_strided_slice %24 {offsets = [8, 24], sizes = [8, 8], strides = [1, 1]} : vector<32x32xf32> to vector<8x8xf32>
    %109 = arith.subf %105, %108 : vector<8x8xf32>
    %110 = arith.addf %106, %107 : vector<8x8xf32>
    %111 = arith.mulf %109, %109 : vector<8x8xf32>
    %112 = arith.mulf %110, %110 : vector<8x8xf32>
    %113 = arith.addf %111, %112 : vector<8x8xf32>
    %cst_44 = arith.constant 1.59438773E-8 : f32
    %114 = vector.broadcast %cst_44 : f32 to vector<8x8xf32>
    %115 = arith.mulf %114, %113 : vector<8x8xf32>
    %cst_45 = arith.constant 9.99999974E-5 : f32
    %116 = vector.broadcast %cst_45 : f32 to vector<8x8xf32>
    %117 = arith.addf %115, %116 : vector<8x8xf32>
    %118 = math.sqrt %117 : vector<8x8xf32>
    %cst_46 = arith.constant 0.00999999977 : f32
    %119 = vector.broadcast %cst_46 : f32 to vector<8x8xf32>
    %120 = arith.subf %118, %119 : vector<8x8xf32>
    %c0_47 = arith.constant 0 : index
    %c3 = arith.constant 3 : index
    %c0_48 = arith.constant 0 : index
    %c0_49 = arith.constant 0 : index
    %c0_50 = arith.constant 0 : index
    %121 = vector.load %arg5[%c0_47, %c3, %c0_48, %c0_49, %c0_50] : memref<1x7x4x8x8xf32, #tpu.memory_space<vmem>>, vector<1x1x1x8x8xf32>
    %122 = vector.shape_cast %121 : vector<1x1x1x8x8xf32> to vector<8x8xf32>
    %123 = vector.shape_cast %120 : vector<8x8xf32> to vector<1x1x1x8x8xf32>
    tpu.vector_store %arg5[%c0_47, %c3, %c0_48, %c0_49, %c0_50], %123 {strides = array<i32>} : memref<1x7x4x8x8xf32, #tpu.memory_space<vmem>>, vector<1x1x1x8x8xf32>,
    %124 = arith.addf %105, %108 : vector<8x8xf32>
    %125 = arith.subf %106, %107 : vector<8x8xf32>
    %126 = arith.mulf %124, %124 : vector<8x8xf32>
    %127 = arith.mulf %125, %125 : vector<8x8xf32>
    %128 = arith.addf %126, %127 : vector<8x8xf32>
    %cst_51 = arith.constant 1.59438773E-8 : f32
    %129 = vector.broadcast %cst_51 : f32 to vector<8x8xf32>
    %130 = arith.mulf %129, %128 : vector<8x8xf32>
    %cst_52 = arith.constant 9.99999974E-5 : f32
    %131 = vector.broadcast %cst_52 : f32 to vector<8x8xf32>
    %132 = arith.addf %130, %131 : vector<8x8xf32>
    %133 = math.sqrt %132 : vector<8x8xf32>
    %cst_53 = arith.constant 0.00999999977 : f32
    %134 = vector.broadcast %cst_53 : f32 to vector<8x8xf32>
    %135 = arith.subf %133, %134 : vector<8x8xf32>
    %c0_54 = arith.constant 0 : index
    %c4 = arith.constant 4 : index
    %c0_55 = arith.constant 0 : index
    %c0_56 = arith.constant 0 : index
    %c0_57 = arith.constant 0 : index
    %136 = vector.load %arg5[%c0_54, %c4, %c0_55, %c0_56, %c0_57] : memref<1x7x4x8x8xf32, #tpu.memory_space<vmem>>, vector<1x1x1x8x8xf32>
    %137 = vector.shape_cast %136 : vector<1x1x1x8x8xf32> to vector<8x8xf32>
    %138 = vector.shape_cast %135 : vector<8x8xf32> to vector<1x1x1x8x8xf32>
    tpu.vector_store %arg5[%c0_54, %c4, %c0_55, %c0_56, %c0_57], %138 {strides = array<i32>} : memref<1x7x4x8x8xf32, #tpu.memory_space<vmem>>, vector<1x1x1x8x8xf32>,
    %139 = vector.extract_strided_slice %16 {offsets = [1, 0, 0], sizes = [1, 16, 32], strides = [1, 1, 1]} : vector<4x16x32xbf16> to vector<1x16x32xbf16>
    %140 = vector.shape_cast %139 : vector<1x16x32xbf16> to vector<16x32xbf16>
    %cst_58 = arith.constant dense<0.000000e+00> : vector<32x32xf32>
    %141 = tpu.matmul %0, %140, %cst_58 {dimension_numbers = #tpu.dot_dimension_numbers<[1], [0], [0], [1], [0, 0, 1, 1], [], []>} : vector<32x16xbf16>, vector<16x32xbf16>, vector<32x32xf32> -> vector<32x32xf32>
    %142 = vector.extract_strided_slice %17 {offsets = [1, 0, 0], sizes = [1, 16, 32], strides = [1, 1, 1]} : vector<4x16x32xbf16> to vector<1x16x32xbf16>
    %143 = vector.shape_cast %142 : vector<1x16x32xbf16> to vector<16x32xbf16>
    %cst_59 = arith.constant dense<0.000000e+00> : vector<32x32xf32>
    %144 = tpu.matmul %0, %143, %cst_59 {dimension_numbers = #tpu.dot_dimension_numbers<[1], [0], [0], [1], [0, 0, 1, 1], [], []>} : vector<32x16xbf16>, vector<16x32xbf16>, vector<32x32xf32> -> vector<32x32xf32>
    %145 = arith.addf %141, %144 : vector<32x32xf32>
    %146 = vector.extract_strided_slice %145 {offsets = [0, 0], sizes = [8, 8], strides = [1, 1]} : vector<32x32xf32> to vector<8x8xf32>
    %147 = vector.extract_strided_slice %145 {offsets = [0, 8], sizes = [8, 8], strides = [1, 1]} : vector<32x32xf32> to vector<8x8xf32>
    %148 = vector.extract_strided_slice %145 {offsets = [8, 0], sizes = [8, 8], strides = [1, 1]} : vector<32x32xf32> to vector<8x8xf32>
    %149 = vector.extract_strided_slice %145 {offsets = [8, 8], sizes = [8, 8], strides = [1, 1]} : vector<32x32xf32> to vector<8x8xf32>
    %150 = arith.addf %146, %147 : vector<8x8xf32>
    %151 = arith.addf %148, %149 : vector<8x8xf32>
    %152 = arith.addf %150, %151 : vector<8x8xf32>
    %cst_60 = arith.constant 6.250000e-04 : f32
    %153 = vector.broadcast %cst_60 : f32 to vector<8x8xf32>
    %154 = arith.mulf %153, %152 : vector<8x8xf32>
    %c0_61 = arith.constant 0 : index
    %c0_62 = arith.constant 0 : index
    %c1_63 = arith.constant 1 : index
    %c0_64 = arith.constant 0 : index
    %c0_65 = arith.constant 0 : index
    %155 = vector.load %arg5[%c0_61, %c0_62, %c1_63, %c0_64, %c0_65] : memref<1x7x4x8x8xf32, #tpu.memory_space<vmem>>, vector<1x1x1x8x8xf32>
    %156 = vector.shape_cast %155 : vector<1x1x1x8x8xf32> to vector<8x8xf32>
    %157 = vector.shape_cast %154 : vector<8x8xf32> to vector<1x1x1x8x8xf32>
    tpu.vector_store %arg5[%c0_61, %c0_62, %c1_63, %c0_64, %c0_65], %157 {strides = array<i32>} : memref<1x7x4x8x8xf32, #tpu.memory_space<vmem>>, vector<1x1x1x8x8xf32>,
    %158 = vector.extract_strided_slice %145 {offsets = [16, 0], sizes = [8, 8], strides = [1, 1]} : vector<32x32xf32> to vector<8x8xf32>
    %159 = vector.extract_strided_slice %145 {offsets = [16, 8], sizes = [8, 8], strides = [1, 1]} : vector<32x32xf32> to vector<8x8xf32>
    %160 = vector.extract_strided_slice %145 {offsets = [24, 0], sizes = [8, 8], strides = [1, 1]} : vector<32x32xf32> to vector<8x8xf32>
    %161 = vector.extract_strided_slice %145 {offsets = [24, 8], sizes = [8, 8], strides = [1, 1]} : vector<32x32xf32> to vector<8x8xf32>
    %162 = arith.subf %158, %161 : vector<8x8xf32>
    %163 = arith.addf %159, %160 : vector<8x8xf32>
    %164 = arith.mulf %162, %162 : vector<8x8xf32>
    %165 = arith.mulf %163, %163 : vector<8x8xf32>
    %166 = arith.addf %164, %165 : vector<8x8xf32>
    %cst_66 = arith.constant 1.59438773E-8 : f32
    %167 = vector.broadcast %cst_66 : f32 to vector<8x8xf32>
    %168 = arith.mulf %167, %166 : vector<8x8xf32>
    %cst_67 = arith.constant 9.99999974E-5 : f32
    %169 = vector.broadcast %cst_67 : f32 to vector<8x8xf32>
    %170 = arith.addf %168, %169 : vector<8x8xf32>
    %171 = math.sqrt %170 : vector<8x8xf32>
    %cst_68 = arith.constant 0.00999999977 : f32
    %172 = vector.broadcast %cst_68 : f32 to vector<8x8xf32>
    %173 = arith.subf %171, %172 : vector<8x8xf32>
    %c0_69 = arith.constant 0 : index
    %c1_70 = arith.constant 1 : index
    %c1_71 = arith.constant 1 : index
    %c0_72 = arith.constant 0 : index
    %c0_73 = arith.constant 0 : index
    %174 = vector.load %arg5[%c0_69, %c1_70, %c1_71, %c0_72, %c0_73] : memref<1x7x4x8x8xf32, #tpu.memory_space<vmem>>, vector<1x1x1x8x8xf32>
    %175 = vector.shape_cast %174 : vector<1x1x1x8x8xf32> to vector<8x8xf32>
    %176 = vector.shape_cast %173 : vector<8x8xf32> to vector<1x1x1x8x8xf32>
    tpu.vector_store %arg5[%c0_69, %c1_70, %c1_71, %c0_72, %c0_73], %176 {strides = array<i32>} : memref<1x7x4x8x8xf32, #tpu.memory_space<vmem>>, vector<1x1x1x8x8xf32>,
    %177 = arith.addf %158, %161 : vector<8x8xf32>
    %178 = arith.subf %159, %160 : vector<8x8xf32>
    %179 = arith.mulf %177, %177 : vector<8x8xf32>
    %180 = arith.mulf %178, %178 : vector<8x8xf32>
    %181 = arith.addf %179, %180 : vector<8x8xf32>
    %cst_74 = arith.constant 1.59438773E-8 : f32
    %182 = vector.broadcast %cst_74 : f32 to vector<8x8xf32>
    %183 = arith.mulf %182, %181 : vector<8x8xf32>
    %cst_75 = arith.constant 9.99999974E-5 : f32
    %184 = vector.broadcast %cst_75 : f32 to vector<8x8xf32>
    %185 = arith.addf %183, %184 : vector<8x8xf32>
    %186 = math.sqrt %185 : vector<8x8xf32>
    %cst_76 = arith.constant 0.00999999977 : f32
    %187 = vector.broadcast %cst_76 : f32 to vector<8x8xf32>
    %188 = arith.subf %186, %187 : vector<8x8xf32>
    %c0_77 = arith.constant 0 : index
    %c6_78 = arith.constant 6 : index
    %c1_79 = arith.constant 1 : index
    %c0_80 = arith.constant 0 : index
    %c0_81 = arith.constant 0 : index
    %189 = vector.load %arg5[%c0_77, %c6_78, %c1_79, %c0_80, %c0_81] : memref<1x7x4x8x8xf32, #tpu.memory_space<vmem>>, vector<1x1x1x8x8xf32>
    %190 = vector.shape_cast %189 : vector<1x1x1x8x8xf32> to vector<8x8xf32>
    %191 = vector.shape_cast %188 : vector<8x8xf32> to vector<1x1x1x8x8xf32>
    tpu.vector_store %arg5[%c0_77, %c6_78, %c1_79, %c0_80, %c0_81], %191 {strides = array<i32>} : memref<1x7x4x8x8xf32, #tpu.memory_space<vmem>>, vector<1x1x1x8x8xf32>,
    %192 = vector.extract_strided_slice %145 {offsets = [16, 16], sizes = [8, 8], strides = [1, 1]} : vector<32x32xf32> to vector<8x8xf32>
    %193 = vector.extract_strided_slice %145 {offsets = [16, 24], sizes = [8, 8], strides = [1, 1]} : vector<32x32xf32> to vector<8x8xf32>
    %194 = vector.extract_strided_slice %145 {offsets = [24, 16], sizes = [8, 8], strides = [1, 1]} : vector<32x32xf32> to vector<8x8xf32>
    %195 = vector.extract_strided_slice %145 {offsets = [24, 24], sizes = [8, 8], strides = [1, 1]} : vector<32x32xf32> to vector<8x8xf32>
    %196 = arith.subf %192, %195 : vector<8x8xf32>
    %197 = arith.addf %193, %194 : vector<8x8xf32>
    %198 = arith.mulf %196, %196 : vector<8x8xf32>
    %199 = arith.mulf %197, %197 : vector<8x8xf32>
    %200 = arith.addf %198, %199 : vector<8x8xf32>
    %cst_82 = arith.constant 8.13463116E-11 : f32
    %201 = vector.broadcast %cst_82 : f32 to vector<8x8xf32>
    %202 = arith.mulf %201, %200 : vector<8x8xf32>
    %cst_83 = arith.constant 9.99999974E-5 : f32
    %203 = vector.broadcast %cst_83 : f32 to vector<8x8xf32>
    %204 = arith.addf %202, %203 : vector<8x8xf32>
    %205 = math.sqrt %204 : vector<8x8xf32>
    %cst_84 = arith.constant 0.00999999977 : f32
    %206 = vector.broadcast %cst_84 : f32 to vector<8x8xf32>
    %207 = arith.subf %205, %206 : vector<8x8xf32>
    %c0_85 = arith.constant 0 : index
    %c2_86 = arith.constant 2 : index
    %c1_87 = arith.constant 1 : index
    %c0_88 = arith.constant 0 : index
    %c0_89 = arith.constant 0 : index
    %208 = vector.load %arg5[%c0_85, %c2_86, %c1_87, %c0_88, %c0_89] : memref<1x7x4x8x8xf32, #tpu.memory_space<vmem>>, vector<1x1x1x8x8xf32>
    %209 = vector.shape_cast %208 : vector<1x1x1x8x8xf32> to vector<8x8xf32>
    %210 = vector.shape_cast %207 : vector<8x8xf32> to vector<1x1x1x8x8xf32>
    tpu.vector_store %arg5[%c0_85, %c2_86, %c1_87, %c0_88, %c0_89], %210 {strides = array<i32>} : memref<1x7x4x8x8xf32, #tpu.memory_space<vmem>>, vector<1x1x1x8x8xf32>,
    %211 = arith.addf %192, %195 : vector<8x8xf32>
    %212 = arith.subf %193, %194 : vector<8x8xf32>
    %213 = arith.mulf %211, %211 : vector<8x8xf32>
    %214 = arith.mulf %212, %212 : vector<8x8xf32>
    %215 = arith.addf %213, %214 : vector<8x8xf32>
    %cst_90 = arith.constant 8.13463116E-11 : f32
    %216 = vector.broadcast %cst_90 : f32 to vector<8x8xf32>
    %217 = arith.mulf %216, %215 : vector<8x8xf32>
    %cst_91 = arith.constant 9.99999974E-5 : f32
    %218 = vector.broadcast %cst_91 : f32 to vector<8x8xf32>
    %219 = arith.addf %217, %218 : vector<8x8xf32>
    %220 = math.sqrt %219 : vector<8x8xf32>
    %cst_92 = arith.constant 0.00999999977 : f32
    %221 = vector.broadcast %cst_92 : f32 to vector<8x8xf32>
    %222 = arith.subf %220, %221 : vector<8x8xf32>
    %c0_93 = arith.constant 0 : index
    %c5_94 = arith.constant 5 : index
    %c1_95 = arith.constant 1 : index
    %c0_96 = arith.constant 0 : index
    %c0_97 = arith.constant 0 : index
    %223 = vector.load %arg5[%c0_93, %c5_94, %c1_95, %c0_96, %c0_97] : memref<1x7x4x8x8xf32, #tpu.memory_space<vmem>>, vector<1x1x1x8x8xf32>
    %224 = vector.shape_cast %223 : vector<1x1x1x8x8xf32> to vector<8x8xf32>
    %225 = vector.shape_cast %222 : vector<8x8xf32> to vector<1x1x1x8x8xf32>
    tpu.vector_store %arg5[%c0_93, %c5_94, %c1_95, %c0_96, %c0_97], %225 {strides = array<i32>} : memref<1x7x4x8x8xf32, #tpu.memory_space<vmem>>, vector<1x1x1x8x8xf32>,
    %226 = vector.extract_strided_slice %145 {offsets = [0, 16], sizes = [8, 8], strides = [1, 1]} : vector<32x32xf32> to vector<8x8xf32>
    %227 = vector.extract_strided_slice %145 {offsets = [0, 24], sizes = [8, 8], strides = [1, 1]} : vector<32x32xf32> to vector<8x8xf32>
    %228 = vector.extract_strided_slice %145 {offsets = [8, 16], sizes = [8, 8], strides = [1, 1]} : vector<32x32xf32> to vector<8x8xf32>
    %229 = vector.extract_strided_slice %145 {offsets = [8, 24], sizes = [8, 8], strides = [1, 1]} : vector<32x32xf32> to vector<8x8xf32>
    %230 = arith.subf %226, %229 : vector<8x8xf32>
    %231 = arith.addf %227, %228 : vector<8x8xf32>
    %232 = arith.mulf %230, %230 : vector<8x8xf32>
    %233 = arith.mulf %231, %231 : vector<8x8xf32>
    %234 = arith.addf %232, %233 : vector<8x8xf32>
    %cst_98 = arith.constant 1.59438773E-8 : f32
    %235 = vector.broadcast %cst_98 : f32 to vector<8x8xf32>
    %236 = arith.mulf %235, %234 : vector<8x8xf32>
    %cst_99 = arith.constant 9.99999974E-5 : f32
    %237 = vector.broadcast %cst_99 : f32 to vector<8x8xf32>
    %238 = arith.addf %236, %237 : vector<8x8xf32>
    %239 = math.sqrt %238 : vector<8x8xf32>
    %cst_100 = arith.constant 0.00999999977 : f32
    %240 = vector.broadcast %cst_100 : f32 to vector<8x8xf32>
    %241 = arith.subf %239, %240 : vector<8x8xf32>
    %c0_101 = arith.constant 0 : index
    %c3_102 = arith.constant 3 : index
    %c1_103 = arith.constant 1 : index
    %c0_104 = arith.constant 0 : index
    %c0_105 = arith.constant 0 : index
    %242 = vector.load %arg5[%c0_101, %c3_102, %c1_103, %c0_104, %c0_105] : memref<1x7x4x8x8xf32, #tpu.memory_space<vmem>>, vector<1x1x1x8x8xf32>
    %243 = vector.shape_cast %242 : vector<1x1x1x8x8xf32> to vector<8x8xf32>
    %244 = vector.shape_cast %241 : vector<8x8xf32> to vector<1x1x1x8x8xf32>
    tpu.vector_store %arg5[%c0_101, %c3_102, %c1_103, %c0_104, %c0_105], %244 {strides = array<i32>} : memref<1x7x4x8x8xf32, #tpu.memory_space<vmem>>, vector<1x1x1x8x8xf32>,
    %245 = arith.addf %226, %229 : vector<8x8xf32>
    %246 = arith.subf %227, %228 : vector<8x8xf32>
    %247 = arith.mulf %245, %245 : vector<8x8xf32>
    %248 = arith.mulf %246, %246 : vector<8x8xf32>
    %249 = arith.addf %247, %248 : vector<8x8xf32>
    %cst_106 = arith.constant 1.59438773E-8 : f32
    %250 = vector.broadcast %cst_106 : f32 to vector<8x8xf32>
    %251 = arith.mulf %250, %249 : vector<8x8xf32>
    %cst_107 = arith.constant 9.99999974E-5 : f32
    %252 = vector.broadcast %cst_107 : f32 to vector<8x8xf32>
    %253 = arith.addf %251, %252 : vector<8x8xf32>
    %254 = math.sqrt %253 : vector<8x8xf32>
    %cst_108 = arith.constant 0.00999999977 : f32
    %255 = vector.broadcast %cst_108 : f32 to vector<8x8xf32>
    %256 = arith.subf %254, %255 : vector<8x8xf32>
    %c0_109 = arith.constant 0 : index
    %c4_110 = arith.constant 4 : index
    %c1_111 = arith.constant 1 : index
    %c0_112 = arith.constant 0 : index
    %c0_113 = arith.constant 0 : index
    %257 = vector.load %arg5[%c0_109, %c4_110, %c1_111, %c0_112, %c0_113] : memref<1x7x4x8x8xf32, #tpu.memory_space<vmem>>, vector<1x1x1x8x8xf32>
    %258 = vector.shape_cast %257 : vector<1x1x1x8x8xf32> to vector<8x8xf32>
    %259 = vector.shape_cast %256 : vector<8x8xf32> to vector<1x1x1x8x8xf32>
    tpu.vector_store %arg5[%c0_109, %c4_110, %c1_111, %c0_112, %c0_113], %259 {strides = array<i32>} : memref<1x7x4x8x8xf32, #tpu.memory_space<vmem>>, vector<1x1x1x8x8xf32>,
    %260 = vector.extract_strided_slice %16 {offsets = [2, 0, 0], sizes = [1, 16, 32], strides = [1, 1, 1]} : vector<4x16x32xbf16> to vector<1x16x32xbf16>
    %261 = vector.shape_cast %260 : vector<1x16x32xbf16> to vector<16x32xbf16>
    %cst_114 = arith.constant dense<0.000000e+00> : vector<32x32xf32>
    %262 = tpu.matmul %0, %261, %cst_114 {dimension_numbers = #tpu.dot_dimension_numbers<[1], [0], [0], [1], [0, 0, 1, 1], [], []>} : vector<32x16xbf16>, vector<16x32xbf16>, vector<32x32xf32> -> vector<32x32xf32>
    %263 = vector.extract_strided_slice %17 {offsets = [2, 0, 0], sizes = [1, 16, 32], strides = [1, 1, 1]} : vector<4x16x32xbf16> to vector<1x16x32xbf16>
    %264 = vector.shape_cast %263 : vector<1x16x32xbf16> to vector<16x32xbf16>
    %cst_115 = arith.constant dense<0.000000e+00> : vector<32x32xf32>
    %265 = tpu.matmul %0, %264, %cst_115 {dimension_numbers = #tpu.dot_dimension_numbers<[1], [0], [0], [1], [0, 0, 1, 1], [], []>} : vector<32x16xbf16>, vector<16x32xbf16>, vector<32x32xf32> -> vector<32x32xf32>
    %266 = arith.addf %262, %265 : vector<32x32xf32>
    %267 = vector.extract_strided_slice %266 {offsets = [0, 0], sizes = [8, 8], strides = [1, 1]} : vector<32x32xf32> to vector<8x8xf32>
    %268 = vector.extract_strided_slice %266 {offsets = [0, 8], sizes = [8, 8], strides = [1, 1]} : vector<32x32xf32> to vector<8x8xf32>
    %269 = vector.extract_strided_slice %266 {offsets = [8, 0], sizes = [8, 8], strides = [1, 1]} : vector<32x32xf32> to vector<8x8xf32>
    %270 = vector.extract_strided_slice %266 {offsets = [8, 8], sizes = [8, 8], strides = [1, 1]} : vector<32x32xf32> to vector<8x8xf32>
    %271 = arith.addf %267, %268 : vector<8x8xf32>
    %272 = arith.addf %269, %270 : vector<8x8xf32>
    %273 = arith.addf %271, %272 : vector<8x8xf32>
    %cst_116 = arith.constant 6.250000e-04 : f32
    %274 = vector.broadcast %cst_116 : f32 to vector<8x8xf32>
    %275 = arith.mulf %274, %273 : vector<8x8xf32>
    %c0_117 = arith.constant 0 : index
    %c0_118 = arith.constant 0 : index
    %c2_119 = arith.constant 2 : index
    %c0_120 = arith.constant 0 : index
    %c0_121 = arith.constant 0 : index
    %276 = vector.load %arg5[%c0_117, %c0_118, %c2_119, %c0_120, %c0_121] : memref<1x7x4x8x8xf32, #tpu.memory_space<vmem>>, vector<1x1x1x8x8xf32>
    %277 = vector.shape_cast %276 : vector<1x1x1x8x8xf32> to vector<8x8xf32>
    %278 = vector.shape_cast %275 : vector<8x8xf32> to vector<1x1x1x8x8xf32>
    tpu.vector_store %arg5[%c0_117, %c0_118, %c2_119, %c0_120, %c0_121], %278 {strides = array<i32>} : memref<1x7x4x8x8xf32, #tpu.memory_space<vmem>>, vector<1x1x1x8x8xf32>,
    %279 = vector.extract_strided_slice %266 {offsets = [16, 0], sizes = [8, 8], strides = [1, 1]} : vector<32x32xf32> to vector<8x8xf32>
    %280 = vector.extract_strided_slice %266 {offsets = [16, 8], sizes = [8, 8], strides = [1, 1]} : vector<32x32xf32> to vector<8x8xf32>
    %281 = vector.extract_strided_slice %266 {offsets = [24, 0], sizes = [8, 8], strides = [1, 1]} : vector<32x32xf32> to vector<8x8xf32>
    %282 = vector.extract_strided_slice %266 {offsets = [24, 8], sizes = [8, 8], strides = [1, 1]} : vector<32x32xf32> to vector<8x8xf32>
    %283 = arith.subf %279, %282 : vector<8x8xf32>
    %284 = arith.addf %280, %281 : vector<8x8xf32>
    %285 = arith.mulf %283, %283 : vector<8x8xf32>
    %286 = arith.mulf %284, %284 : vector<8x8xf32>
    %287 = arith.addf %285, %286 : vector<8x8xf32>
    %cst_122 = arith.constant 1.59438773E-8 : f32
    %288 = vector.broadcast %cst_122 : f32 to vector<8x8xf32>
    %289 = arith.mulf %288, %287 : vector<8x8xf32>
    %cst_123 = arith.constant 9.99999974E-5 : f32
    %290 = vector.broadcast %cst_123 : f32 to vector<8x8xf32>
    %291 = arith.addf %289, %290 : vector<8x8xf32>
    %292 = math.sqrt %291 : vector<8x8xf32>
    %cst_124 = arith.constant 0.00999999977 : f32
    %293 = vector.broadcast %cst_124 : f32 to vector<8x8xf32>
    %294 = arith.subf %292, %293 : vector<8x8xf32>
    %c0_125 = arith.constant 0 : index
    %c1_126 = arith.constant 1 : index
    %c2_127 = arith.constant 2 : index
    %c0_128 = arith.constant 0 : index
    %c0_129 = arith.constant 0 : index
    %295 = vector.load %arg5[%c0_125, %c1_126, %c2_127, %c0_128, %c0_129] : memref<1x7x4x8x8xf32, #tpu.memory_space<vmem>>, vector<1x1x1x8x8xf32>
    %296 = vector.shape_cast %295 : vector<1x1x1x8x8xf32> to vector<8x8xf32>
    %297 = vector.shape_cast %294 : vector<8x8xf32> to vector<1x1x1x8x8xf32>
    tpu.vector_store %arg5[%c0_125, %c1_126, %c2_127, %c0_128, %c0_129], %297 {strides = array<i32>} : memref<1x7x4x8x8xf32, #tpu.memory_space<vmem>>, vector<1x1x1x8x8xf32>,
    %298 = arith.addf %279, %282 : vector<8x8xf32>
    %299 = arith.subf %280, %281 : vector<8x8xf32>
    %300 = arith.mulf %298, %298 : vector<8x8xf32>
    %301 = arith.mulf %299, %299 : vector<8x8xf32>
    %302 = arith.addf %300, %301 : vector<8x8xf32>
    %cst_130 = arith.constant 1.59438773E-8 : f32
    %303 = vector.broadcast %cst_130 : f32 to vector<8x8xf32>
    %304 = arith.mulf %303, %302 : vector<8x8xf32>
    %cst_131 = arith.constant 9.99999974E-5 : f32
    %305 = vector.broadcast %cst_131 : f32 to vector<8x8xf32>
    %306 = arith.addf %304, %305 : vector<8x8xf32>
    %307 = math.sqrt %306 : vector<8x8xf32>
    %cst_132 = arith.constant 0.00999999977 : f32
    %308 = vector.broadcast %cst_132 : f32 to vector<8x8xf32>
    %309 = arith.subf %307, %308 : vector<8x8xf32>
    %c0_133 = arith.constant 0 : index
    %c6_134 = arith.constant 6 : index
    %c2_135 = arith.constant 2 : index
    %c0_136 = arith.constant 0 : index
    %c0_137 = arith.constant 0 : index
    %310 = vector.load %arg5[%c0_133, %c6_134, %c2_135, %c0_136, %c0_137] : memref<1x7x4x8x8xf32, #tpu.memory_space<vmem>>, vector<1x1x1x8x8xf32>
    %311 = vector.shape_cast %310 : vector<1x1x1x8x8xf32> to vector<8x8xf32>
    %312 = vector.shape_cast %309 : vector<8x8xf32> to vector<1x1x1x8x8xf32>
    tpu.vector_store %arg5[%c0_133, %c6_134, %c2_135, %c0_136, %c0_137], %312 {strides = array<i32>} : memref<1x7x4x8x8xf32, #tpu.memory_space<vmem>>, vector<1x1x1x8x8xf32>,
    %313 = vector.extract_strided_slice %266 {offsets = [16, 16], sizes = [8, 8], strides = [1, 1]} : vector<32x32xf32> to vector<8x8xf32>
    %314 = vector.extract_strided_slice %266 {offsets = [16, 24], sizes = [8, 8], strides = [1, 1]} : vector<32x32xf32> to vector<8x8xf32>
    %315 = vector.extract_strided_slice %266 {offsets = [24, 16], sizes = [8, 8], strides = [1, 1]} : vector<32x32xf32> to vector<8x8xf32>
    %316 = vector.extract_strided_slice %266 {offsets = [24, 24], sizes = [8, 8], strides = [1, 1]} : vector<32x32xf32> to vector<8x8xf32>
    %317 = arith.subf %313, %316 : vector<8x8xf32>
    %318 = arith.addf %314, %315 : vector<8x8xf32>
    %319 = arith.mulf %317, %317 : vector<8x8xf32>
    %320 = arith.mulf %318, %318 : vector<8x8xf32>
    %321 = arith.addf %319, %320 : vector<8x8xf32>
    %cst_138 = arith.constant 8.13463116E-11 : f32
    %322 = vector.broadcast %cst_138 : f32 to vector<8x8xf32>
    %323 = arith.mulf %322, %321 : vector<8x8xf32>
    %cst_139 = arith.constant 9.99999974E-5 : f32
    %324 = vector.broadcast %cst_139 : f32 to vector<8x8xf32>
    %325 = arith.addf %323, %324 : vector<8x8xf32>
    %326 = math.sqrt %325 : vector<8x8xf32>
    %cst_140 = arith.constant 0.00999999977 : f32
    %327 = vector.broadcast %cst_140 : f32 to vector<8x8xf32>
    %328 = arith.subf %326, %327 : vector<8x8xf32>
    %c0_141 = arith.constant 0 : index
    %c2_142 = arith.constant 2 : index
    %c2_143 = arith.constant 2 : index
    %c0_144 = arith.constant 0 : index
    %c0_145 = arith.constant 0 : index
    %329 = vector.load %arg5[%c0_141, %c2_142, %c2_143, %c0_144, %c0_145] : memref<1x7x4x8x8xf32, #tpu.memory_space<vmem>>, vector<1x1x1x8x8xf32>
    %330 = vector.shape_cast %329 : vector<1x1x1x8x8xf32> to vector<8x8xf32>
    %331 = vector.shape_cast %328 : vector<8x8xf32> to vector<1x1x1x8x8xf32>
    tpu.vector_store %arg5[%c0_141, %c2_142, %c2_143, %c0_144, %c0_145], %331 {strides = array<i32>} : memref<1x7x4x8x8xf32, #tpu.memory_space<vmem>>, vector<1x1x1x8x8xf32>,
    %332 = arith.addf %313, %316 : vector<8x8xf32>
    %333 = arith.subf %314, %315 : vector<8x8xf32>
    %334 = arith.mulf %332, %332 : vector<8x8xf32>
    %335 = arith.mulf %333, %333 : vector<8x8xf32>
    %336 = arith.addf %334, %335 : vector<8x8xf32>
    %cst_146 = arith.constant 8.13463116E-11 : f32
    %337 = vector.broadcast %cst_146 : f32 to vector<8x8xf32>
    %338 = arith.mulf %337, %336 : vector<8x8xf32>
    %cst_147 = arith.constant 9.99999974E-5 : f32
    %339 = vector.broadcast %cst_147 : f32 to vector<8x8xf32>
    %340 = arith.addf %338, %339 : vector<8x8xf32>
    %341 = math.sqrt %340 : vector<8x8xf32>
    %cst_148 = arith.constant 0.00999999977 : f32
    %342 = vector.broadcast %cst_148 : f32 to vector<8x8xf32>
    %343 = arith.subf %341, %342 : vector<8x8xf32>
    %c0_149 = arith.constant 0 : index
    %c5_150 = arith.constant 5 : index
    %c2_151 = arith.constant 2 : index
    %c0_152 = arith.constant 0 : index
    %c0_153 = arith.constant 0 : index
    %344 = vector.load %arg5[%c0_149, %c5_150, %c2_151, %c0_152, %c0_153] : memref<1x7x4x8x8xf32, #tpu.memory_space<vmem>>, vector<1x1x1x8x8xf32>
    %345 = vector.shape_cast %344 : vector<1x1x1x8x8xf32> to vector<8x8xf32>
    %346 = vector.shape_cast %343 : vector<8x8xf32> to vector<1x1x1x8x8xf32>
    tpu.vector_store %arg5[%c0_149, %c5_150, %c2_151, %c0_152, %c0_153], %346 {strides = array<i32>} : memref<1x7x4x8x8xf32, #tpu.memory_space<vmem>>, vector<1x1x1x8x8xf32>,
    %347 = vector.extract_strided_slice %266 {offsets = [0, 16], sizes = [8, 8], strides = [1, 1]} : vector<32x32xf32> to vector<8x8xf32>
    %348 = vector.extract_strided_slice %266 {offsets = [0, 24], sizes = [8, 8], strides = [1, 1]} : vector<32x32xf32> to vector<8x8xf32>
    %349 = vector.extract_strided_slice %266 {offsets = [8, 16], sizes = [8, 8], strides = [1, 1]} : vector<32x32xf32> to vector<8x8xf32>
    %350 = vector.extract_strided_slice %266 {offsets = [8, 24], sizes = [8, 8], strides = [1, 1]} : vector<32x32xf32> to vector<8x8xf32>
    %351 = arith.subf %347, %350 : vector<8x8xf32>
    %352 = arith.addf %348, %349 : vector<8x8xf32>
    %353 = arith.mulf %351, %351 : vector<8x8xf32>
    %354 = arith.mulf %352, %352 : vector<8x8xf32>
    %355 = arith.addf %353, %354 : vector<8x8xf32>
    %cst_154 = arith.constant 1.59438773E-8 : f32
    %356 = vector.broadcast %cst_154 : f32 to vector<8x8xf32>
    %357 = arith.mulf %356, %355 : vector<8x8xf32>
    %cst_155 = arith.constant 9.99999974E-5 : f32
    %358 = vector.broadcast %cst_155 : f32 to vector<8x8xf32>
    %359 = arith.addf %357, %358 : vector<8x8xf32>
    %360 = math.sqrt %359 : vector<8x8xf32>
    %cst_156 = arith.constant 0.00999999977 : f32
    %361 = vector.broadcast %cst_156 : f32 to vector<8x8xf32>
    %362 = arith.subf %360, %361 : vector<8x8xf32>
    %c0_157 = arith.constant 0 : index
    %c3_158 = arith.constant 3 : index
    %c2_159 = arith.constant 2 : index
    %c0_160 = arith.constant 0 : index
    %c0_161 = arith.constant 0 : index
    %363 = vector.load %arg5[%c0_157, %c3_158, %c2_159, %c0_160, %c0_161] : memref<1x7x4x8x8xf32, #tpu.memory_space<vmem>>, vector<1x1x1x8x8xf32>
    %364 = vector.shape_cast %363 : vector<1x1x1x8x8xf32> to vector<8x8xf32>
    %365 = vector.shape_cast %362 : vector<8x8xf32> to vector<1x1x1x8x8xf32>
    tpu.vector_store %arg5[%c0_157, %c3_158, %c2_159, %c0_160, %c0_161], %365 {strides = array<i32>} : memref<1x7x4x8x8xf32, #tpu.memory_space<vmem>>, vector<1x1x1x8x8xf32>,
    %366 = arith.addf %347, %350 : vector<8x8xf32>
    %367 = arith.subf %348, %349 : vector<8x8xf32>
    %368 = arith.mulf %366, %366 : vector<8x8xf32>
    %369 = arith.mulf %367, %367 : vector<8x8xf32>
    %370 = arith.addf %368, %369 : vector<8x8xf32>
    %cst_162 = arith.constant 1.59438773E-8 : f32
    %371 = vector.broadcast %cst_162 : f32 to vector<8x8xf32>
    %372 = arith.mulf %371, %370 : vector<8x8xf32>
    %cst_163 = arith.constant 9.99999974E-5 : f32
    %373 = vector.broadcast %cst_163 : f32 to vector<8x8xf32>
    %374 = arith.addf %372, %373 : vector<8x8xf32>
    %375 = math.sqrt %374 : vector<8x8xf32>
    %cst_164 = arith.constant 0.00999999977 : f32
    %376 = vector.broadcast %cst_164 : f32 to vector<8x8xf32>
    %377 = arith.subf %375, %376 : vector<8x8xf32>
    %c0_165 = arith.constant 0 : index
    %c4_166 = arith.constant 4 : index
    %c2_167 = arith.constant 2 : index
    %c0_168 = arith.constant 0 : index
    %c0_169 = arith.constant 0 : index
    %378 = vector.load %arg5[%c0_165, %c4_166, %c2_167, %c0_168, %c0_169] : memref<1x7x4x8x8xf32, #tpu.memory_space<vmem>>, vector<1x1x1x8x8xf32>
    %379 = vector.shape_cast %378 : vector<1x1x1x8x8xf32> to vector<8x8xf32>
    %380 = vector.shape_cast %377 : vector<8x8xf32> to vector<1x1x1x8x8xf32>
    tpu.vector_store %arg5[%c0_165, %c4_166, %c2_167, %c0_168, %c0_169], %380 {strides = array<i32>} : memref<1x7x4x8x8xf32, #tpu.memory_space<vmem>>, vector<1x1x1x8x8xf32>,
    %381 = vector.extract_strided_slice %16 {offsets = [3, 0, 0], sizes = [1, 16, 32], strides = [1, 1, 1]} : vector<4x16x32xbf16> to vector<1x16x32xbf16>
    %382 = vector.shape_cast %381 : vector<1x16x32xbf16> to vector<16x32xbf16>
    %cst_170 = arith.constant dense<0.000000e+00> : vector<32x32xf32>
    %383 = tpu.matmul %0, %382, %cst_170 {dimension_numbers = #tpu.dot_dimension_numbers<[1], [0], [0], [1], [0, 0, 1, 1], [], []>} : vector<32x16xbf16>, vector<16x32xbf16>, vector<32x32xf32> -> vector<32x32xf32>
    %384 = vector.extract_strided_slice %17 {offsets = [3, 0, 0], sizes = [1, 16, 32], strides = [1, 1, 1]} : vector<4x16x32xbf16> to vector<1x16x32xbf16>
    %385 = vector.shape_cast %384 : vector<1x16x32xbf16> to vector<16x32xbf16>
    %cst_171 = arith.constant dense<0.000000e+00> : vector<32x32xf32>
    %386 = tpu.matmul %0, %385, %cst_171 {dimension_numbers = #tpu.dot_dimension_numbers<[1], [0], [0], [1], [0, 0, 1, 1], [], []>} : vector<32x16xbf16>, vector<16x32xbf16>, vector<32x32xf32> -> vector<32x32xf32>
    %387 = arith.addf %383, %386 : vector<32x32xf32>
    %388 = vector.extract_strided_slice %387 {offsets = [0, 0], sizes = [8, 8], strides = [1, 1]} : vector<32x32xf32> to vector<8x8xf32>
    %389 = vector.extract_strided_slice %387 {offsets = [0, 8], sizes = [8, 8], strides = [1, 1]} : vector<32x32xf32> to vector<8x8xf32>
    %390 = vector.extract_strided_slice %387 {offsets = [8, 0], sizes = [8, 8], strides = [1, 1]} : vector<32x32xf32> to vector<8x8xf32>
    %391 = vector.extract_strided_slice %387 {offsets = [8, 8], sizes = [8, 8], strides = [1, 1]} : vector<32x32xf32> to vector<8x8xf32>
    %392 = arith.addf %388, %389 : vector<8x8xf32>
    %393 = arith.addf %390, %391 : vector<8x8xf32>
    %394 = arith.addf %392, %393 : vector<8x8xf32>
    %cst_172 = arith.constant 6.250000e-04 : f32
    %395 = vector.broadcast %cst_172 : f32 to vector<8x8xf32>
    %396 = arith.mulf %395, %394 : vector<8x8xf32>
    %c0_173 = arith.constant 0 : index
    %c0_174 = arith.constant 0 : index
    %c3_175 = arith.constant 3 : index
    %c0_176 = arith.constant 0 : index
    %c0_177 = arith.constant 0 : index
    %397 = vector.load %arg5[%c0_173, %c0_174, %c3_175, %c0_176, %c0_177] : memref<1x7x4x8x8xf32, #tpu.memory_space<vmem>>, vector<1x1x1x8x8xf32>
    %398 = vector.shape_cast %397 : vector<1x1x1x8x8xf32> to vector<8x8xf32>
    %399 = vector.shape_cast %396 : vector<8x8xf32> to vector<1x1x1x8x8xf32>
    tpu.vector_store %arg5[%c0_173, %c0_174, %c3_175, %c0_176, %c0_177], %399 {strides = array<i32>} : memref<1x7x4x8x8xf32, #tpu.memory_space<vmem>>, vector<1x1x1x8x8xf32>,
    %400 = vector.extract_strided_slice %387 {offsets = [16, 0], sizes = [8, 8], strides = [1, 1]} : vector<32x32xf32> to vector<8x8xf32>
    %401 = vector.extract_strided_slice %387 {offsets = [16, 8], sizes = [8, 8], strides = [1, 1]} : vector<32x32xf32> to vector<8x8xf32>
    %402 = vector.extract_strided_slice %387 {offsets = [24, 0], sizes = [8, 8], strides = [1, 1]} : vector<32x32xf32> to vector<8x8xf32>
    %403 = vector.extract_strided_slice %387 {offsets = [24, 8], sizes = [8, 8], strides = [1, 1]} : vector<32x32xf32> to vector<8x8xf32>
    %404 = arith.subf %400, %403 : vector<8x8xf32>
    %405 = arith.addf %401, %402 : vector<8x8xf32>
    %406 = arith.mulf %404, %404 : vector<8x8xf32>
    %407 = arith.mulf %405, %405 : vector<8x8xf32>
    %408 = arith.addf %406, %407 : vector<8x8xf32>
    %cst_178 = arith.constant 1.59438773E-8 : f32
    %409 = vector.broadcast %cst_178 : f32 to vector<8x8xf32>
    %410 = arith.mulf %409, %408 : vector<8x8xf32>
    %cst_179 = arith.constant 9.99999974E-5 : f32
    %411 = vector.broadcast %cst_179 : f32 to vector<8x8xf32>
    %412 = arith.addf %410, %411 : vector<8x8xf32>
    %413 = math.sqrt %412 : vector<8x8xf32>
    %cst_180 = arith.constant 0.00999999977 : f32
    %414 = vector.broadcast %cst_180 : f32 to vector<8x8xf32>
    %415 = arith.subf %413, %414 : vector<8x8xf32>
    %c0_181 = arith.constant 0 : index
    %c1_182 = arith.constant 1 : index
    %c3_183 = arith.constant 3 : index
    %c0_184 = arith.constant 0 : index
    %c0_185 = arith.constant 0 : index
    %416 = vector.load %arg5[%c0_181, %c1_182, %c3_183, %c0_184, %c0_185] : memref<1x7x4x8x8xf32, #tpu.memory_space<vmem>>, vector<1x1x1x8x8xf32>
    %417 = vector.shape_cast %416 : vector<1x1x1x8x8xf32> to vector<8x8xf32>
    %418 = vector.shape_cast %415 : vector<8x8xf32> to vector<1x1x1x8x8xf32>
    tpu.vector_store %arg5[%c0_181, %c1_182, %c3_183, %c0_184, %c0_185], %418 {strides = array<i32>} : memref<1x7x4x8x8xf32, #tpu.memory_space<vmem>>, vector<1x1x1x8x8xf32>,
    %419 = arith.addf %400, %403 : vector<8x8xf32>
    %420 = arith.subf %401, %402 : vector<8x8xf32>
    %421 = arith.mulf %419, %419 : vector<8x8xf32>
    %422 = arith.mulf %420, %420 : vector<8x8xf32>
    %423 = arith.addf %421, %422 : vector<8x8xf32>
    %cst_186 = arith.constant 1.59438773E-8 : f32
    %424 = vector.broadcast %cst_186 : f32 to vector<8x8xf32>
    %425 = arith.mulf %424, %423 : vector<8x8xf32>
    %cst_187 = arith.constant 9.99999974E-5 : f32
    %426 = vector.broadcast %cst_187 : f32 to vector<8x8xf32>
    %427 = arith.addf %425, %426 : vector<8x8xf32>
    %428 = math.sqrt %427 : vector<8x8xf32>
    %cst_188 = arith.constant 0.00999999977 : f32
    %429 = vector.broadcast %cst_188 : f32 to vector<8x8xf32>
    %430 = arith.subf %428, %429 : vector<8x8xf32>
    %c0_189 = arith.constant 0 : index
    %c6_190 = arith.constant 6 : index
    %c3_191 = arith.constant 3 : index
    %c0_192 = arith.constant 0 : index
    %c0_193 = arith.constant 0 : index
    %431 = vector.load %arg5[%c0_189, %c6_190, %c3_191, %c0_192, %c0_193] : memref<1x7x4x8x8xf32, #tpu.memory_space<vmem>>, vector<1x1x1x8x8xf32>
    %432 = vector.shape_cast %431 : vector<1x1x1x8x8xf32> to vector<8x8xf32>
    %433 = vector.shape_cast %430 : vector<8x8xf32> to vector<1x1x1x8x8xf32>
    tpu.vector_store %arg5[%c0_189, %c6_190, %c3_191, %c0_192, %c0_193], %433 {strides = array<i32>} : memref<1x7x4x8x8xf32, #tpu.memory_space<vmem>>, vector<1x1x1x8x8xf32>,
    %434 = vector.extract_strided_slice %387 {offsets = [16, 16], sizes = [8, 8], strides = [1, 1]} : vector<32x32xf32> to vector<8x8xf32>
    %435 = vector.extract_strided_slice %387 {offsets = [16, 24], sizes = [8, 8], strides = [1, 1]} : vector<32x32xf32> to vector<8x8xf32>
    %436 = vector.extract_strided_slice %387 {offsets = [24, 16], sizes = [8, 8], strides = [1, 1]} : vector<32x32xf32> to vector<8x8xf32>
    %437 = vector.extract_strided_slice %387 {offsets = [24, 24], sizes = [8, 8], strides = [1, 1]} : vector<32x32xf32> to vector<8x8xf32>
    %438 = arith.subf %434, %437 : vector<8x8xf32>
    %439 = arith.addf %435, %436 : vector<8x8xf32>
    %440 = arith.mulf %438, %438 : vector<8x8xf32>
    %441 = arith.mulf %439, %439 : vector<8x8xf32>
    %442 = arith.addf %440, %441 : vector<8x8xf32>
    %cst_194 = arith.constant 8.13463116E-11 : f32
    %443 = vector.broadcast %cst_194 : f32 to vector<8x8xf32>
    %444 = arith.mulf %443, %442 : vector<8x8xf32>
    %cst_195 = arith.constant 9.99999974E-5 : f32
    %445 = vector.broadcast %cst_195 : f32 to vector<8x8xf32>
    %446 = arith.addf %444, %445 : vector<8x8xf32>
    %447 = math.sqrt %446 : vector<8x8xf32>
    %cst_196 = arith.constant 0.00999999977 : f32
    %448 = vector.broadcast %cst_196 : f32 to vector<8x8xf32>
    %449 = arith.subf %447, %448 : vector<8x8xf32>
    %c0_197 = arith.constant 0 : index
    %c2_198 = arith.constant 2 : index
    %c3_199 = arith.constant 3 : index
    %c0_200 = arith.constant 0 : index
    %c0_201 = arith.constant 0 : index
    %450 = vector.load %arg5[%c0_197, %c2_198, %c3_199, %c0_200, %c0_201] : memref<1x7x4x8x8xf32, #tpu.memory_space<vmem>>, vector<1x1x1x8x8xf32>
    %451 = vector.shape_cast %450 : vector<1x1x1x8x8xf32> to vector<8x8xf32>
    %452 = vector.shape_cast %449 : vector<8x8xf32> to vector<1x1x1x8x8xf32>
    tpu.vector_store %arg5[%c0_197, %c2_198, %c3_199, %c0_200, %c0_201], %452 {strides = array<i32>} : memref<1x7x4x8x8xf32, #tpu.memory_space<vmem>>, vector<1x1x1x8x8xf32>,
    %453 = arith.addf %434, %437 : vector<8x8xf32>
    %454 = arith.subf %435, %436 : vector<8x8xf32>
    %455 = arith.mulf %453, %453 : vector<8x8xf32>
    %456 = arith.mulf %454, %454 : vector<8x8xf32>
    %457 = arith.addf %455, %456 : vector<8x8xf32>
    %cst_202 = arith.constant 8.13463116E-11 : f32
    %458 = vector.broadcast %cst_202 : f32 to vector<8x8xf32>
    %459 = arith.mulf %458, %457 : vector<8x8xf32>
    %cst_203 = arith.constant 9.99999974E-5 : f32
    %460 = vector.broadcast %cst_203 : f32 to vector<8x8xf32>
    %461 = arith.addf %459, %460 : vector<8x8xf32>
    %462 = math.sqrt %461 : vector<8x8xf32>
    %cst_204 = arith.constant 0.00999999977 : f32
    %463 = vector.broadcast %cst_204 : f32 to vector<8x8xf32>
    %464 = arith.subf %462, %463 : vector<8x8xf32>
    %c0_205 = arith.constant 0 : index
    %c5_206 = arith.constant 5 : index
    %c3_207 = arith.constant 3 : index
    %c0_208 = arith.constant 0 : index
    %c0_209 = arith.constant 0 : index
    %465 = vector.load %arg5[%c0_205, %c5_206, %c3_207, %c0_208, %c0_209] : memref<1x7x4x8x8xf32, #tpu.memory_space<vmem>>, vector<1x1x1x8x8xf32>
    %466 = vector.shape_cast %465 : vector<1x1x1x8x8xf32> to vector<8x8xf32>
    %467 = vector.shape_cast %464 : vector<8x8xf32> to vector<1x1x1x8x8xf32>
    tpu.vector_store %arg5[%c0_205, %c5_206, %c3_207, %c0_208, %c0_209], %467 {strides = array<i32>} : memref<1x7x4x8x8xf32, #tpu.memory_space<vmem>>, vector<1x1x1x8x8xf32>,
    %468 = vector.extract_strided_slice %387 {offsets = [0, 16], sizes = [8, 8], strides = [1, 1]} : vector<32x32xf32> to vector<8x8xf32>
    %469 = vector.extract_strided_slice %387 {offsets = [0, 24], sizes = [8, 8], strides = [1, 1]} : vector<32x32xf32> to vector<8x8xf32>
    %470 = vector.extract_strided_slice %387 {offsets = [8, 16], sizes = [8, 8], strides = [1, 1]} : vector<32x32xf32> to vector<8x8xf32>
    %471 = vector.extract_strided_slice %387 {offsets = [8, 24], sizes = [8, 8], strides = [1, 1]} : vector<32x32xf32> to vector<8x8xf32>
    %472 = arith.subf %468, %471 : vector<8x8xf32>
    %473 = arith.addf %469, %470 : vector<8x8xf32>
    %474 = arith.mulf %472, %472 : vector<8x8xf32>
    %475 = arith.mulf %473, %473 : vector<8x8xf32>
    %476 = arith.addf %474, %475 : vector<8x8xf32>
    %cst_210 = arith.constant 1.59438773E-8 : f32
    %477 = vector.broadcast %cst_210 : f32 to vector<8x8xf32>
    %478 = arith.mulf %477, %476 : vector<8x8xf32>
    %cst_211 = arith.constant 9.99999974E-5 : f32
    %479 = vector.broadcast %cst_211 : f32 to vector<8x8xf32>
    %480 = arith.addf %478, %479 : vector<8x8xf32>
    %481 = math.sqrt %480 : vector<8x8xf32>
    %cst_212 = arith.constant 0.00999999977 : f32
    %482 = vector.broadcast %cst_212 : f32 to vector<8x8xf32>
    %483 = arith.subf %481, %482 : vector<8x8xf32>
    %c0_213 = arith.constant 0 : index
    %c3_214 = arith.constant 3 : index
    %c3_215 = arith.constant 3 : index
    %c0_216 = arith.constant 0 : index
    %c0_217 = arith.constant 0 : index
    %484 = vector.load %arg5[%c0_213, %c3_214, %c3_215, %c0_216, %c0_217] : memref<1x7x4x8x8xf32, #tpu.memory_space<vmem>>, vector<1x1x1x8x8xf32>
    %485 = vector.shape_cast %484 : vector<1x1x1x8x8xf32> to vector<8x8xf32>
    %486 = vector.shape_cast %483 : vector<8x8xf32> to vector<1x1x1x8x8xf32>
    tpu.vector_store %arg5[%c0_213, %c3_214, %c3_215, %c0_216, %c0_217], %486 {strides = array<i32>} : memref<1x7x4x8x8xf32, #tpu.memory_space<vmem>>, vector<1x1x1x8x8xf32>,
    %487 = arith.addf %468, %471 : vector<8x8xf32>
    %488 = arith.subf %469, %470 : vector<8x8xf32>
    %489 = arith.mulf %487, %487 : vector<8x8xf32>
    %490 = arith.mulf %488, %488 : vector<8x8xf32>
    %491 = arith.addf %489, %490 : vector<8x8xf32>
    %cst_218 = arith.constant 1.59438773E-8 : f32
    %492 = vector.broadcast %cst_218 : f32 to vector<8x8xf32>
    %493 = arith.mulf %492, %491 : vector<8x8xf32>
    %cst_219 = arith.constant 9.99999974E-5 : f32
    %494 = vector.broadcast %cst_219 : f32 to vector<8x8xf32>
    %495 = arith.addf %493, %494 : vector<8x8xf32>
    %496 = math.sqrt %495 : vector<8x8xf32>
    %cst_220 = arith.constant 0.00999999977 : f32
    %497 = vector.broadcast %cst_220 : f32 to vector<8x8xf32>
    %498 = arith.subf %496, %497 : vector<8x8xf32>
    %c0_221 = arith.constant 0 : index
    %c4_222 = arith.constant 4 : index
    %c3_223 = arith.constant 3 : index
    %c0_224 = arith.constant 0 : index
    %c0_225 = arith.constant 0 : index
    %499 = vector.load %arg5[%c0_221, %c4_222, %c3_223, %c0_224, %c0_225] : memref<1x7x4x8x8xf32, #tpu.memory_space<vmem>>, vector<1x1x1x8x8xf32>
    %500 = vector.shape_cast %499 : vector<1x1x1x8x8xf32> to vector<8x8xf32>
    %501 = vector.shape_cast %498 : vector<8x8xf32> to vector<1x1x1x8x8xf32>
    tpu.vector_store %arg5[%c0_221, %c4_222, %c3_223, %c0_224, %c0_225], %501 {strides = array<i32>} : memref<1x7x4x8x8xf32, #tpu.memory_space<vmem>>, vector<1x1x1x8x8xf32>,
    return
  }
  func.func @transform_0(%arg0: i32, %arg1: i32) -> (i32, i32) {
    %c0_i32 = arith.constant 0 : i32
    %c0_i32_0 = arith.constant 0 : i32
    %c0_i32_1 = arith.constant 0 : i32
    return %c0_i32, %c0_i32_0 : i32, i32
  }
  func.func @transform_1(%arg0: i32, %arg1: i32) -> (i32, i32) {
    %c0_i32 = arith.constant 0 : i32
    %c0_i32_0 = arith.constant 0 : i32
    %c0_i32_1 = arith.constant 0 : i32
    return %c0_i32, %c0_i32_0 : i32, i32
  }
  func.func @transform_2(%arg0: i32, %arg1: i32) -> (i32, i32, i32, i32) {
    %c0_i32 = arith.constant 0 : i32
    %c0_i32_0 = arith.constant 0 : i32
    %c0_i32_1 = arith.constant 0 : i32
    return %arg0, %arg1, %c0_i32, %c0_i32_0 : i32, i32, i32, i32
  }
  func.func @transform_3(%arg0: i32, %arg1: i32) -> (i32, i32, i32, i32, i32) {
    %c0_i32 = arith.constant 0 : i32
    %c0_i32_0 = arith.constant 0 : i32
    %c0_i32_1 = arith.constant 0 : i32
    %c0_i32_2 = arith.constant 0 : i32
    return %arg0, %c0_i32, %arg1, %c0_i32_0, %c0_i32_1 : i32, i32, i32, i32, i32
  }
}

</mosaic_0001>

<llo_original>
// kernel: tpu_custom_call.1
$region0: #{tpu_custom_call.1}
  #allocation0 [shape = 'u32[]', space=smem, size = 0x4, offset = 0x4, fixed_abs, tag = 'smem constant byte address 0x4 - core index']
  #allocation1 [shape = 'u32[144,128]{1,0:T(1,128)}', space=vmem, size = 0x12000, scoped, tag = 'internal scratch']
  %s0 = inlined_call_operand.hbm [shape: bf16[32,16], index: 0, kind: input, shape index: {}]
  %s1 = inlined_call_operand.hbm [shape: bf16[16,32], index: 1, kind: input, shape index: {}]
  %s2 = inlined_call_operand.hbm [shape: f32[2,4,16,16], index: 2, kind: input, shape index: {}]
  %s3 = inlined_call_operand.hbm [shape: f32[2,7,4,8,8], index: 3, kind: output, shape index: {}]
  %s4 = sld [smem:[#allocation0]]
  $region57: #{tpu_custom_call.1} parent=0
    _
  %s6 = ssub.s32 1, %s4
  %s7 = scalar_select 0, %s6, %s4
  $region1: #{tpu_custom_call.1} parent=0
    #allocation2 [shape = 'u8[8192]{0}', space=vmem, size = 0x2000, scoped, tag = 'input window, operand 0, single buffered']
    #allocation3 [shape = 's32[2]{0}', space=sflag, size = 0x8, scoped, tag = 'scoped memory for tpu_custom_call.1']
    #allocation4 [shape = 's32[2]{0}', space=sflag, size = 0x8, scoped, tag = 'scoped memory for tpu_custom_call.1']
    #allocation5 [shape = 'u8[4096]{0}', space=vmem, size = 0x1000, scoped, tag = 'input window, operand 1, single buffered']
    #allocation6 [shape = 's32[1]{0}', space=sflag, size = 0x4, scoped, tag = 'scoped memory for tpu_custom_call.1']
    #allocation7 [shape = 'u8[65536]{0}', space=vmem, size = 0x10000, scoped, tag = 'input window, operand 2']
    #allocation8 [shape = 'u8[229376]{0}', space=vmem, size = 0x38000, scoped, tag = 'output window, operand 0']
    %8 = vsyncpa [#allocation3], 0
    %9 = vsyncpa [#allocation6], 0
    %10 = vsyncpa [#allocation4], 0
    %s11 = scalar_lea.sflag [#allocation4], 1
    %12 = vsyncpa %s11, 0
    loop: start=0, step=1, limit=4
    $region2: #{tpu_custom_call.1} parent=1 // loop_pre_header
      _
    $region3: #{tpu_custom_call.1} parent=1 // loop_header
      %s14 = sphi 0, %s18
      %p15 = scmp.ge.s32.totalorder %s14, 4
      %s21 = sphi 0, %s33
      %s22 = sphi 0, %s29
      %s23 = sphi 0, %s21
      %s24 = sphi 0, %s22
      %s25 = sphi 0, %s23
      %s26 = sphi 0, %s24
      %s34 = sphi 0, %s34
      %s36 = sphi 0, %s34
      %s37 = sphi 0, %s36
      %s51 = sphi 0, %s37
      %s55 = sphi 0, %s55
      %s57 = sphi 0, %s55
      %s58 = sphi 0, %s57
      %s72 = sphi 0, %s58
      %s80 = sphi 0, %s82
      %s83 = sphi 0, %s80
      %s84 = sphi 0, %s83
      %s100 = sphi 0, %s84
      %s108 = sphi 0, %s110
      %s111 = sphi 0, %s108
      %s112 = sphi 0, %s111
      %s128 = sphi 0, %s112
    $region4: #{tpu_custom_call.1} parent=1 // loop_header_branch
      %17 = sbr.rel (%p15) target = $region8
    $region5: #{tpu_custom_call.1} parent=1 // loop_body
      %s19 = ssub.s32 %s14, 1
      %s20 = ssub.s32 %s14, 2
      %s27 = sadd.s32 1, %s22
      %p28 = scmp.ge.s32.totalorder %s27, 1
      %s29 = scalar_select %p28, 0, %s27
      %s30 = sadd.s32 1, %s21
      %s31 = scalar_select %p28, %s30, %s21
      %p32 = scmp.ge.s32.totalorder %s31, 2
      %s33 = scalar_select %p32, 0, %s31
      %s35 = sadd.s32 %s34, 1
      %p38 = scmp.eq.s32.totalorder %s14, 1
      %p39 = scmp.ne.s32.totalorder %s34, %s36
      %p40 = scmp.eq.s32.totalorder %s14, 0
      %p41 = por %p39, %p40
      %p42 = scmp.ne.s32.totalorder %s34, %s36
      %p43 = scmp.eq.s32.totalorder %s19, 1
      %p44 = por %p42, %p43
      %p45 = scmp.ne.s32.totalorder %s36, %s37
      %p46 = scmp.eq.s32.totalorder %s19, 0
      %p47 = por %p45, %p46
      %p48 = scmp.ne.s32.totalorder %s36, %s37
      %p49 = scmp.eq.s32.totalorder %s20, 1
      %p50 = por %p48, %p49
      %p52 = scmp.ne.s32.totalorder %s37, %s51
      %p53 = scmp.eq.s32.totalorder %s20, 0
      %p54 = por %p52, %p53
      %s56 = sadd.s32 %s55, 1
      %p59 = scmp.eq.s32.totalorder %s14, 1
      %p60 = scmp.ne.s32.totalorder %s55, %s57
      %p61 = scmp.eq.s32.totalorder %s14, 0
      %p62 = por %p60, %p61
      %p63 = scmp.ne.s32.totalorder %s55, %s57
      %p64 = scmp.eq.s32.totalorder %s19, 1
      %p65 = por %p63, %p64
      %p66 = scmp.ne.s32.totalorder %s57, %s58
      %p67 = scmp.eq.s32.totalorder %s19, 0
      %p68 = por %p66, %p67
      %p69 = scmp.ne.s32.totalorder %s57, %s58
      %p70 = scmp.eq.s32.totalorder %s20, 1
      %p71 = por %p69, %p70
      %p73 = scmp.ne.s32.totalorder %s58, %s72
      %p74 = scmp.eq.s32.totalorder %s20, 0
      %p75 = por %p73, %p74
      %s76 = ssub.s32 %s21, %s33
      %s77 = ssub.s32 %s22, %s29
      %s78 = sor.u32 %s76, %s77
      %p79 = scmp.eq.s32.totalorder %s78, 0
      %s81 = sadd.s32 %s80, 1
      %s82 = scalar_select %p79, %s80, %s81
      %p85 = pneg %p79
      %p86 = scmp.eq.s32.totalorder %s14, 1
      %p87 = por %p85, %p86
      %p88 = scmp.ne.s32.totalorder %s80, %s83
      %p89 = scmp.eq.s32.totalorder %s14, 0
      %p90 = por %p88, %p89
      %p91 = scmp.ne.s32.totalorder %s80, %s83
      %p92 = scmp.eq.s32.totalorder %s19, 1
      %p93 = por %p91, %p92
      %p94 = scmp.ne.s32.totalorder %s83, %s84
      %p95 = scmp.eq.s32.totalorder %s19, 0
      %p96 = por %p94, %p95
      %p97 = scmp.ne.s32.totalorder %s83, %s84
      %p98 = scmp.eq.s32.totalorder %s20, 1
      %p99 = por %p97, %p98
      %p101 = scmp.ne.s32.totalorder %s84, %s100
      %p102 = scmp.eq.s32.totalorder %s20, 0
      %p103 = por %p101, %p102
      %s104 = ssub.s32 %s21, %s33
      %s105 = ssub.s32 %s22, %s29
      %s106 = sor.u32 %s104, %s105
      %p107 = scmp.eq.s32.totalorder %s106, 0
      %s109 = sadd.s32 %s108, 1
      %s110 = scalar_select %p107, %s108, %s109
      %p113 = pneg %p107
      %p114 = scmp.eq.s32.totalorder %s14, 1
      %p115 = por %p113, %p114
      %p116 = scmp.ne.s32.totalorder %s108, %s111
      %p117 = scmp.eq.s32.totalorder %s14, 0
      %p118 = por %p116, %p117
      %p119 = scmp.ne.s32.totalorder %s108, %s111
      %p120 = scmp.eq.s32.totalorder %s19, 1
      %p121 = por %p119, %p120
      %p122 = scmp.ne.s32.totalorder %s111, %s112
      %p123 = scmp.eq.s32.totalorder %s19, 0
      %p124 = por %p122, %p123
      %p125 = scmp.ne.s32.totalorder %s111, %s112
      %p126 = scmp.eq.s32.totalorder %s20, 1
      %p127 = por %p125, %p126
      %p129 = scmp.ne.s32.totalorder %s112, %s128
      %p130 = scmp.eq.s32.totalorder %s20, 0
      %p131 = por %p129, %p130
      %p132 = scmp.le.s32.totalorder 1, %s14
      %p133 = scmp.lt.s32.totalorder %s14, 3
      %p134 = pnand %p132, %p133
      %p135 = pneg %p134
      // Predicated region
      $region9: #{tpu_custom_call.1} parent=5 // pred_check
        _
      $region10: #{tpu_custom_call.1} parent=5 // pred_check_branch
        %137 = sbr.rel (%p134) target = $region12
      $region11: #{tpu_custom_call.1} parent=5 // pred_region
        %s138 = ssub.s32 %s14, 1
        // Predicated region
        $region13: #{tpu_custom_call.1} parent=11 // pred_check
          %p139 = pneg %p47
        $region14: #{tpu_custom_call.1} parent=11 // pred_check_branch
          %141 = sbr.rel (%p139) target = $region16
        $region15: #{tpu_custom_call.1} parent=11 // pred_region
          %s143 = ssub.s32 256, 256
          %144 = vsyncadd [#allocation3], %s143
          %s145 = sshll.u32 [#allocation2], 4
          %s146 = int_to_ptr.vmem [resolvable:$true] %s145
          %151 = dma.hbm_to_vmem [thread:$0]  %s0, 256, %s146, [#allocation3], 64, 64, 4
        $region16: #{tpu_custom_call.1} parent=11 // pred_fallthru
          _
        // Predicated region
        $region17: #{tpu_custom_call.1} parent=11 // pred_check
          %p152 = pneg %p68
        $region18: #{tpu_custom_call.1} parent=11 // pred_check_branch
          %154 = sbr.rel (%p152) target = $region20
        $region19: #{tpu_custom_call.1} parent=11 // pred_region
          %s156 = ssub.s32 128, 128
          %157 = vsyncadd [#allocation6], %s156
          %s158 = sshll.u32 [#allocation5], 4
          %s159 = int_to_ptr.vmem [resolvable:$true] %s158
          %164 = dma.hbm_to_vmem [thread:$0]  %s1, 128, %s159, [#allocation6], 64, 64, 4
        $region20: #{tpu_custom_call.1} parent=11 // pred_fallthru
          _
      $region12: #{tpu_custom_call.1} parent=5 // pred_fallthru
        _
      %p165 = scmp.lt.s32.totalorder %s14, 2
      // Predicated region
      $region21: #{tpu_custom_call.1} parent=5 // pred_check
        %p166 = pneg %p165
      $region22: #{tpu_custom_call.1} parent=5 // pred_check_branch
        %168 = sbr.rel (%p166) target = $region24
      $region23: #{tpu_custom_call.1} parent=5 // pred_region
        // Predicated region
        $region25: #{tpu_custom_call.1} parent=23 // pred_check
          %p169 = pneg %p90
        $region26: #{tpu_custom_call.1} parent=23 // pred_check_branch
          %171 = sbr.rel (%p169) target = $region28
        $region27: #{tpu_custom_call.1} parent=23 // pred_region
          %s172 = sand.u32 %s14, 1
          %s173 = scalar_lea.sflag [#allocation3], %s172
          %s174 = sand.u32 %s80, 1
          %s175 = smul.addr %s174, 64
          %s176 = scalar_lea.vmem [#allocation7], %s175
          %s177 = smul.u32 4, %s22
          %s179 = ssub.s32 1024, 1024
          %180 = vsyncadd %s173, %s179
          %s181 = smul.addr %s177, 2
          %s182 = smul.addr %s21, 8
          %s183 = sadd.s32 %s181, %s182
          %s184 = smul.addr %s183, 128
          %s185 = scalar_lea.hbm %s2, %s184
          %s186 = sshll.u32 %s176, 4
          %s187 = int_to_ptr.vmem [resolvable:$true] %s186
          %192 = dma.hbm_to_vmem [thread:$0]  %s185, 1024, %s187, %s173, 128, 128, 8
        $region28: #{tpu_custom_call.1} parent=23 // pred_fallthru
          _
      $region24: #{tpu_custom_call.1} parent=5 // pred_fallthru
        _
      %p193 = scmp.le.s32.totalorder 1, %s14
      %p194 = scmp.lt.s32.totalorder %s14, 3
      %p195 = pnand %p193, %p194
      %p196 = pneg %p195
      // Predicated region
      $region29: #{tpu_custom_call.1} parent=5 // pred_check
        _
      $region30: #{tpu_custom_call.1} parent=5 // pred_check_branch
        %198 = sbr.rel (%p195) target = $region32
      $region31: #{tpu_custom_call.1} parent=5 // pred_region
        %s199 = ssub.s32 %s14, 1
        // Predicated region
        $region33: #{tpu_custom_call.1} parent=31 // pred_check
          %p200 = pneg %p47
        $region34: #{tpu_custom_call.1} parent=31 // pred_check_branch
          %202 = sbr.rel (%p200) target = $region36
        $region35: #{tpu_custom_call.1} parent=31 // pred_region
          %203 = dma.done [#allocation3], 256
        $region36: #{tpu_custom_call.1} parent=31 // pred_fallthru
          _
        // Predicated region
        $region37: #{tpu_custom_call.1} parent=31 // pred_check
          %p204 = pneg %p68
        $region38: #{tpu_custom_call.1} parent=31 // pred_check_branch
          %206 = sbr.rel (%p204) target = $region40
        $region39: #{tpu_custom_call.1} parent=31 // pred_region
          %207 = dma.done [#allocation6], 128
        $region40: #{tpu_custom_call.1} parent=31 // pred_fallthru
          _
        %s208 = sand.u32 %s19, 1
        %s209 = scalar_lea.sflag [#allocation3], %s208
        %s210 = sand.u32 %s83, 1
        %s211 = smul.addr %s210, 64
        %s212 = scalar_lea.vmem [#allocation7], %s211
        // Predicated region
        $region41: #{tpu_custom_call.1} parent=31 // pred_check
          %p213 = pneg %p96
        $region42: #{tpu_custom_call.1} parent=31 // pred_check_branch
          %215 = sbr.rel (%p213) target = $region44
        $region43: #{tpu_custom_call.1} parent=31 // pred_region
          %216 = dma.done %s209, 1024
        $region44: #{tpu_custom_call.1} parent=31 // pred_fallthru
          _
        %p217 = pneg %p47
        %p218 = pneg %p44
        %p219 = pneg %p68
        %p220 = pneg %p65
        %s221 = sand.u32 %s19, 1
        %s222 = scalar_lea.sflag [#allocation3], %s221
        %s223 = sand.u32 %s83, 1
        %s224 = smul.addr %s223, 64
        %s225 = scalar_lea.vmem [#allocation7], %s224
        %p226 = pneg %p96
        %p227 = pneg %p93
        %p228 = pneg %p124
        %p229 = pneg %p121
        %s230 = sand.u32 %s111, 1
        %s231 = scalar_lea.sflag [#allocation4], %s230
        %s232 = sand.u32 %s111, 1
        %s233 = smul.addr %s232, 224
        %s234 = scalar_lea.vmem [#allocation8], %s233
        %s235 = smul.u32 4, %s24
        %s236 = smul.u32 4, %s24
        %v238 = vld [vmem:[#allocation2] sm:$0xf]
        %v239 = vld [vmem:[#allocation2 + $0x4] sm:$0xf]
        %v240 = vld [vmem:[#allocation2 + $0x8] sm:$0xf]
        %v241 = vld [vmem:[#allocation2 + $0xc] sm:$0xf]
        %v242 = vld [vmem:[#allocation5] sm:$0xf]
        %v243 = vld [vmem:[#allocation5 + $0x4] sm:$0xf]
        %v244 = vld [vmem:[%s212] sm:$0xff]
        %v245 = vld [vmem:[%s212 + $0x8] sm:$0xff]
        %v246 = vld [vmem:[%s212 + $0x10] sm:$0xff]
        %v247 = vld [vmem:[%s212 + $0x18] sm:$0xff]
        %v248 = vld [vmem:[%s212 + $0x20] sm:$0xff]
        %v249 = vld [vmem:[%s212 + $0x28] sm:$0xff]
        %v250 = vld [vmem:[%s212 + $0x30] sm:$0xff]
        %v251 = vld [vmem:[%s212 + $0x38] sm:$0xff]
        %v252 = vpack.c.bf16 %v245, %v244
        %v253 = vpack.c.bf16 %v247, %v246
        %v254 = vpack.c.bf16 %v249, %v248
        %v255 = vpack.c.bf16 %v251, %v250
        %v256 = vunpack.c.l.bf16 %v252
        %v257 = vunpack.c.h.bf16 %v252
        %v258 = vunpack.c.l.bf16 %v253
        %v259 = vunpack.c.h.bf16 %v253
        %v260 = vunpack.c.l.bf16 %v254
        %v261 = vunpack.c.h.bf16 %v254
        %v262 = vunpack.c.l.bf16 %v255
        %v263 = vunpack.c.h.bf16 %v255
        %v264 = vsub.f32 %v244, %v256
        %v265 = vsub.f32 %v245, %v257
        %v266 = vsub.f32 %v246, %v258
        %v267 = vsub.f32 %v247, %v259
        %v268 = vsub.f32 %v248, %v260
        %v269 = vsub.f32 %v249, %v261
        %v270 = vsub.f32 %v250, %v262
        %v271 = vsub.f32 %v251, %v263
        %v272 = vpack.c.bf16 %v265, %v264
        %v273 = vpack.c.bf16 %v267, %v266
        %v274 = vpack.c.bf16 %v269, %v268
        %v275 = vpack.c.bf16 %v271, %v270
        %v278 = vunpack.c.l.b16 %v242
        %v279 = vunpack.c.l.b16 %v243
        %v280 = vpack.c.b16 %v279, %v278
        %vm282 = vcmask 130048
        %v284 = vsel %vm282, %v272, 0
        %v287 = vsel %vm282, %v273, 0
        %v290 = vsel %vm282, %v274, 0
        %v293 = vsel %vm282, %v275, 0
        %295 = vmatprep.subr.bf16.mxu0 0
        %296 = vmatpush1.bf16.msra.mxu0 %v280
        %297 = vmatprep.subr.bf16.mxu0 0
        %298 = vmatpush1.bf16.msra.mxu0 0
        %299 = vmatprep.subr.bf16.mxu0 0
        %300 = vmatpush1.bf16.msra.mxu0 0
        %301 = vmatprep.subr.bf16.mxu0 0
        %302 = vmatpush1.bf16.msra.mxu0 0
        %303 = vmatprep.subr.bf16.mxu0 0
        %304 = vmatpush1.bf16.msra.mxu0 0
        %305 = vmatprep.subr.bf16.mxu0 0
        %306 = vmatpush1.bf16.msra.mxu0 0
        %307 = vmatprep.subr.bf16.mxu0 0
        %308 = vmatpush1.bf16.msra.mxu0 0
        %309 = vmatprep.subr.bf16.mxu0 0
        %310 = vmatpush1.bf16.msra.mxu0 0
        %311 = vmatprep.subr.bf16.mxu0 0
        %312 = vmatpush1.bf16.msra.mxu0 0
        %313 = vmatprep.subr.bf16.mxu0 0
        %314 = vmatpush1.bf16.msra.mxu0 0
        %315 = vmatprep.subr.bf16.mxu0 0
        %316 = vmatpush1.bf16.msra.mxu0 0
        %317 = vmatprep.subr.bf16.mxu0 0
        %318 = vmatpush1.bf16.msra.mxu0 0
        %319 = vmatprep.subr.bf16.mxu0 0
        %320 = vmatpush1.bf16.msra.mxu0 0
        %321 = vmatprep.subr.bf16.mxu0 0
        %322 = vmatpush1.bf16.msra.mxu0 0
        %323 = vmatprep.subr.bf16.mxu0 0
        %324 = vmatpush1.bf16.msra.mxu0 0
        %325 = vmatprep.subr.bf16.mxu0 0
        %326 = vmatpush1.bf16.msra.mxu0 0
        %327 = vmatprep.mubr.bf16.mxu0 0
        %328 = vmatmul.mubr.bf16.gmra.mrb[0].mxu0 %v284
        %v329 = vpop.f32.mrb[0].mxu0
        %v330 = vadd.f32 0.0, %v329
        %v331 = vpop.f32.mrb[0].mxu0
        %v332 = vpop.f32.mrb[0].mxu0
        %v333 = vadd.f32 0.0, %v332
        %v334 = vpop.f32.mrb[0].mxu0
        %335 = vmatprep.mubr.bf16.mxu0 0
        %336 = vmatmul.mubr.bf16.gmra.mrb[0].mxu0 %v287
        %v337 = vpop.f32.mrb[0].mxu0
        %v338 = vadd.f32 0.0, %v337
        %v339 = vpop.f32.mrb[0].mxu0
        %v340 = vpop.f32.mrb[0].mxu0
        %v341 = vadd.f32 0.0, %v340
        %v342 = vpop.f32.mrb[0].mxu0
        %343 = vmatprep.mubr.bf16.mxu0 0
        %344 = vmatmul.mubr.bf16.gmra.mrb[0].mxu0 %v290
        %v345 = vpop.f32.mrb[0].mxu0
        %v346 = vadd.f32 0.0, %v345
        %v347 = vpop.f32.mrb[0].mxu0
        %v348 = vpop.f32.mrb[0].mxu0
        %v349 = vadd.f32 0.0, %v348
        %v350 = vpop.f32.mrb[0].mxu0
        %351 = vmatprep.mubr.bf16.mxu0 0
        %352 = vmatmul.mubr.bf16.gmra.mrb[0].mxu0 %v293
        %v353 = vpop.f32.mrb[0].mxu0
        %v354 = vadd.f32 0.0, %v353
        %v355 = vpop.f32.mrb[0].mxu0
        %v356 = vpop.f32.mrb[0].mxu0
        %v357 = vadd.f32 0.0, %v356
        %v358 = vpop.f32.mrb[0].mxu0
        %359 = vdwg.mxu0
        %v361 = vsel %vm282, %v252, 0
        %v364 = vsel %vm282, %v253, 0
        %v367 = vsel %vm282, %v254, 0
        %v370 = vsel %vm282, %v255, 0
        %372 = vmatprep.subr.bf16.mxu0 0
        %373 = vmatpush1.bf16.msra.mxu0 %v280
        %374 = vmatprep.subr.bf16.mxu0 0
        %375 = vmatpush1.bf16.msra.mxu0 0
        %376 = vmatprep.subr.bf16.mxu0 0
        %377 = vmatpush1.bf16.msra.mxu0 0
        %378 = vmatprep.subr.bf16.mxu0 0
        %379 = vmatpush1.bf16.msra.mxu0 0
        %380 = vmatprep.subr.bf16.mxu0 0
        %381 = vmatpush1.bf16.msra.mxu0 0
        %382 = vmatprep.subr.bf16.mxu0 0
        %383 = vmatpush1.bf16.msra.mxu0 0
        %384 = vmatprep.subr.bf16.mxu0 0
        %385 = vmatpush1.bf16.msra.mxu0 0
        %386 = vmatprep.subr.bf16.mxu0 0
        %387 = vmatpush1.bf16.msra.mxu0 0
        %388 = vmatprep.subr.bf16.mxu0 0
        %389 = vmatpush1.bf16.msra.mxu0 0
        %390 = vmatprep.subr.bf16.mxu0 0
        %391 = vmatpush1.bf16.msra.mxu0 0
        %392 = vmatprep.subr.bf16.mxu0 0
        %393 = vmatpush1.bf16.msra.mxu0 0
        %394 = vmatprep.subr.bf16.mxu0 0
        %395 = vmatpush1.bf16.msra.mxu0 0
        %396 = vmatprep.subr.bf16.mxu0 0
        %397 = vmatpush1.bf16.msra.mxu0 0
        %398 = vmatprep.subr.bf16.mxu0 0
        %399 = vmatpush1.bf16.msra.mxu0 0
        %400 = vmatprep.subr.bf16.mxu0 0
        %401 = vmatpush1.bf16.msra.mxu0 0
        %402 = vmatprep.subr.bf16.mxu0 0
        %403 = vmatpush1.bf16.msra.mxu0 0
        %404 = vmatprep.mubr.bf16.mxu0 0
        %405 = vmatmul.mubr.bf16.gmra.mrb[0].mxu0 %v361
        %v406 = vpop.f32.mrb[0].mxu0
        %v407 = vadd.f32 %v330, %v406
        %v408 = vpop.f32.mrb[0].mxu0
        %v409 = vpop.f32.mrb[0].mxu0
        %v410 = vadd.f32 %v333, %v409
        %v411 = vpop.f32.mrb[0].mxu0
        %412 = vmatprep.mubr.bf16.mxu0 0
        %413 = vmatmul.mubr.bf16.gmra.mrb[0].mxu0 %v364
        %v414 = vpop.f32.mrb[0].mxu0
        %v415 = vadd.f32 %v338, %v414
        %v416 = vpop.f32.mrb[0].mxu0
        %v417 = vpop.f32.mrb[0].mxu0
        %v418 = vadd.f32 %v341, %v417
        %v419 = vpop.f32.mrb[0].mxu0
        %420 = vmatprep.mubr.bf16.mxu0 0
        %421 = vmatmul.mubr.bf16.gmra.mrb[0].mxu0 %v367
        %v422 = vpop.f32.mrb[0].mxu0
        %v423 = vadd.f32 %v346, %v422
        %v424 = vpop.f32.mrb[0].mxu0
        %v425 = vpop.f32.mrb[0].mxu0
        %v426 = vadd.f32 %v349, %v425
        %v427 = vpop.f32.mrb[0].mxu0
        %428 = vmatprep.mubr.bf16.mxu0 0
        %429 = vmatmul.mubr.bf16.gmra.mrb[0].mxu0 %v370
        %v430 = vpop.f32.mrb[0].mxu0
        %v431 = vadd.f32 %v354, %v430
        %v432 = vpop.f32.mrb[0].mxu0
        %v433 = vpop.f32.mrb[0].mxu0
        %v434 = vadd.f32 %v357, %v433
        %v435 = vpop.f32.mrb[0].mxu0
        %436 = vdwg.mxu0
        %v437 = vpack.c.bf16 %v410, %v407
        %v438 = vpack.c.bf16 %v418, %v415
        %v439 = vpack.c.bf16 %v426, %v423
        %v440 = vpack.c.bf16 %v434, %v431
        %v441 = vunpack.c.l.bf16 %v437
        %v442 = vunpack.c.h.bf16 %v437
        %v443 = vunpack.c.l.bf16 %v438
        %v444 = vunpack.c.h.bf16 %v438
        %v445 = vunpack.c.l.bf16 %v439
        %v446 = vunpack.c.h.bf16 %v439
        %v447 = vunpack.c.l.bf16 %v440
        %v448 = vunpack.c.h.bf16 %v440
        %v449 = vsub.f32 %v407, %v441
        %v450 = vsub.f32 %v410, %v442
        %v451 = vsub.f32 %v415, %v443
        %v452 = vsub.f32 %v418, %v444
        %v453 = vsub.f32 %v423, %v445
        %v454 = vsub.f32 %v426, %v446
        %v455 = vsub.f32 %v431, %v447
        %v456 = vsub.f32 %v434, %v448
        %v457 = vpack.c.bf16 %v450, %v449
        %v458 = vpack.c.bf16 %v452, %v451
        %v459 = vpack.c.bf16 %v454, %v453
        %v460 = vpack.c.bf16 %v456, %v455
        %v465 = vunpack.c.l.b16 %v238
        %v466 = vunpack.c.l.b16 %v239
        %v467 = vunpack.c.l.b16 %v240
        %v468 = vunpack.c.l.b16 %v241
        %v469 = vpack.c.b16 %v466, %v465
        %v470 = vpack.c.b16 %v468, %v467
        %v472 = vsel %vm282, %v469, 0
        %v475 = vsel %vm282, %v470, 0
        %477 = vmatprep.subr.bf16.mxu0 0
        %478 = vmatpush1.bf16.msra.mxu0 %v457
        %479 = vmatprep.subr.bf16.mxu0 0
        %480 = vmatpush1.bf16.msra.mxu0 0
        %481 = vmatprep.subr.bf16.mxu0 0
        %482 = vmatpush1.bf16.msra.mxu0 0
        %483 = vmatprep.subr.bf16.mxu0 0
        %484 = vmatpush1.bf16.msra.mxu0 0
        %485 = vmatprep.subr.bf16.mxu0 0
        %486 = vmatpush1.bf16.msra.mxu0 0
        %487 = vmatprep.subr.bf16.mxu0 0
        %488 = vmatpush1.bf16.msra.mxu0 0
        %489 = vmatprep.subr.bf16.mxu0 0
        %490 = vmatpush1.bf16.msra.mxu0 0
        %491 = vmatprep.subr.bf16.mxu0 0
        %492 = vmatpush1.bf16.msra.mxu0 0
        %493 = vmatprep.subr.bf16.mxu0 0
        %494 = vmatpush1.bf16.msra.mxu0 0
        %495 = vmatprep.subr.bf16.mxu0 0
        %496 = vmatpush1.bf16.msra.mxu0 0
        %497 = vmatprep.subr.bf16.mxu0 0
        %498 = vmatpush1.bf16.msra.mxu0 0
        %499 = vmatprep.subr.bf16.mxu0 0
        %500 = vmatpush1.bf16.msra.mxu0 0
        %501 = vmatprep.subr.bf16.mxu0 0
        %502 = vmatpush1.bf16.msra.mxu0 0
        %503 = vmatprep.subr.bf16.mxu0 0
        %504 = vmatpush1.bf16.msra.mxu0 0
        %505 = vmatprep.subr.bf16.mxu0 0
        %506 = vmatpush1.bf16.msra.mxu0 0
        %507 = vmatprep.subr.bf16.mxu0 0
        %508 = vmatpush1.bf16.msra.mxu0 0
        %509 = vmatprep.mubr.bf16.mxu0 0
        %510 = vmatmul.mubr.bf16.gmra.mrb[0].mxu0 %v472
        %v511 = vpop.f32.mrb[0].mxu0
        %v512 = vadd.f32 0.0, %v511
        %v513 = vpop.f32.mrb[0].mxu0
        %v514 = vpop.f32.mrb[0].mxu0
        %v515 = vadd.f32 0.0, %v514
        %v516 = vpop.f32.mrb[0].mxu0
        %517 = vmatprep.mubr.bf16.mxu0 0
        %518 = vmatmul.mubr.bf16.gmra.mrb[0].mxu0 %v475
        %v519 = vpop.f32.mrb[0].mxu0
        %v520 = vadd.f32 0.0, %v519
        %v521 = vpop.f32.mrb[0].mxu0
        %v522 = vpop.f32.mrb[0].mxu0
        %v523 = vadd.f32 0.0, %v522
        %v524 = vpop.f32.mrb[0].mxu0
        %525 = vdwg.mxu0
        %526 = vmatprep.subr.bf16.mxu0 0
        %527 = vmatpush1.bf16.msra.mxu0 %v437
        %528 = vmatprep.subr.bf16.mxu0 0
        %529 = vmatpush1.bf16.msra.mxu0 0
        %530 = vmatprep.subr.bf16.mxu0 0
        %531 = vmatpush1.bf16.msra.mxu0 0
        %532 = vmatprep.subr.bf16.mxu0 0
        %533 = vmatpush1.bf16.msra.mxu0 0
        %534 = vmatprep.subr.bf16.mxu0 0
        %535 = vmatpush1.bf16.msra.mxu0 0
        %536 = vmatprep.subr.bf16.mxu0 0
        %537 = vmatpush1.bf16.msra.mxu0 0
        %538 = vmatprep.subr.bf16.mxu0 0
        %539 = vmatpush1.bf16.msra.mxu0 0
        %540 = vmatprep.subr.bf16.mxu0 0
        %541 = vmatpush1.bf16.msra.mxu0 0
        %542 = vmatprep.subr.bf16.mxu0 0
        %543 = vmatpush1.bf16.msra.mxu0 0
        %544 = vmatprep.subr.bf16.mxu0 0
        %545 = vmatpush1.bf16.msra.mxu0 0
        %546 = vmatprep.subr.bf16.mxu0 0
        %547 = vmatpush1.bf16.msra.mxu0 0
        %548 = vmatprep.subr.bf16.mxu0 0
        %549 = vmatpush1.bf16.msra.mxu0 0
        %550 = vmatprep.subr.bf16.mxu0 0
        %551 = vmatpush1.bf16.msra.mxu0 0
        %552 = vmatprep.subr.bf16.mxu0 0
        %553 = vmatpush1.bf16.msra.mxu0 0
        %554 = vmatprep.subr.bf16.mxu0 0
        %555 = vmatpush1.bf16.msra.mxu0 0
        %556 = vmatprep.subr.bf16.mxu0 0
        %557 = vmatpush1.bf16.msra.mxu0 0
        %558 = vmatprep.mubr.bf16.mxu0 0
        %559 = vmatmul.mubr.bf16.gmra.mrb[0].mxu0 %v472
        %v560 = vpop.f32.mrb[0].mxu0
        %v561 = vadd.f32 %v512, %v560
        %v562 = vpop.f32.mrb[0].mxu0
        %v563 = vpop.f32.mrb[0].mxu0
        %v564 = vadd.f32 %v515, %v563
        %v565 = vpop.f32.mrb[0].mxu0
        %566 = vmatprep.mubr.bf16.mxu0 0
        %567 = vmatmul.mubr.bf16.gmra.mrb[0].mxu0 %v475
        %v568 = vpop.f32.mrb[0].mxu0
        %v569 = vadd.f32 %v520, %v568
        %v570 = vpop.f32.mrb[0].mxu0
        %v571 = vpop.f32.mrb[0].mxu0
        %v572 = vadd.f32 %v523, %v571
        %v573 = vpop.f32.mrb[0].mxu0
        %574 = vdwg.mxu0
        %576 = vrot.lane.b32.xlu0 %v561, 120
        %v577 = vpop.permute.xlu0 %576
        %v579 = vadd.f32 %v561, %v577
        %581 = vrot.lane.b32.xlu0 %v564, 120
        %v582 = vpop.permute.xlu0 %581
        %v584 = vadd.f32 %v564, %v582
        %v585 = vadd.f32 %v579, %v584
        %v586 = vmul.f32 %v585, 0.000625
        %vm587 = vcmask 64512
        %588 = vst.msk [vmem:[%s234] sm:$0xff] %vm587, %v586
        %590 = vrot.lane.b32.xlu0 %v572, 120
        %v591 = vpop.permute.xlu0 %590
        %v593 = vsub.f32 %v569, %v591
        %594 = vrot.lane.b32.xlu0 %v572, 8
        %v595 = vpop.permute.xlu0 %594
        %v597 = vadd.f32 %v569, %v595
        %v598 = vmul.f32 %v593, %v593
        %v599 = vmul.f32 %v597, %v597
        %601 = vrot.lane.b32.xlu0 %v599, 120
        %v602 = vpop.permute.xlu0 %601
        %v604 = vadd.f32 %v598, %v602
        %v605 = vmul.f32 %v604, 1.5943877e-08
        %v606 = vadd.f32 %v605, 0.0001
        %v607 = vrsqrt.pop %v606
        %v608 = vmul.f32 %v606, %v607
        %vm609 = vcmp.eq.f32.partialorder %v606, inf
        %v610 = vsel %vm609, %v606, %v608
        %vm611 = vcmp.eq.f32.partialorder %v606, 0.0
        %v612 = vand.u32 %v606, 2147483648
        %v613 = vsel %vm611, %v612, %v610
        %v614 = vsub.f32 %v613, 0.01
        %s615 = scalar_lea.vmem %s234, 32 [#allocation8]
        %616 = vst.msk [vmem:[%s615] sm:$0xff] %vm587, %v614
        %v617 = vadd.f32 %v569, %v591
        %v618 = vsub.f32 %v569, %v595
        %v619 = vmul.f32 %v617, %v617
        %v620 = vmul.f32 %v618, %v618
        %622 = vrot.lane.b32.xlu0 %v620, 120
        %v623 = vpop.permute.xlu0 %622
        %v625 = vadd.f32 %v619, %v623
        %v626 = vmul.f32 %v625, 1.5943877e-08
        %v627 = vadd.f32 %v626, 0.0001
        %v628 = vrsqrt.pop %v627
        %v629 = vmul.f32 %v627, %v628
        %vm630 = vcmp.eq.f32.partialorder %v627, inf
        %v631 = vsel %vm630, %v627, %v629
        %vm632 = vcmp.eq.f32.partialorder %v627, 0.0
        %v633 = vand.u32 %v627, 2147483648
        %v634 = vsel %vm632, %v633, %v631
        %v635 = vsub.f32 %v634, 0.01
        %s636 = scalar_lea.vmem %s234, 192 [#allocation8]
        %637 = vst.msk [vmem:[%s636] sm:$0xff] %vm587, %v635
        %v638 = vmul.f32 %v604, 8.134631e-11
        %v639 = vadd.f32 %v638, 0.0001
        %v640 = vrsqrt.pop %v639
        %v641 = vmul.f32 %v639, %v640
        %vm642 = vcmp.eq.f32.partialorder %v639, inf
        %v643 = vsel %vm642, %v639, %v641
        %vm644 = vcmp.eq.f32.partialorder %v639, 0.0
        %v645 = vand.u32 %v639, 2147483648
        %v646 = vsel %vm644, %v645, %v643
        %v647 = vsub.f32 %v646, 0.01
        %649 = vrot.lane.b32.xlu0 %v647, 112
        %v650 = vpop.permute.xlu0 %649
        %s652 = scalar_lea.vmem %s234, 64 [#allocation8]
        %653 = vst.msk [vmem:[%s652] sm:$0xff] %vm587, %v650
        %v654 = vmul.f32 %v625, 8.134631e-11
        %v655 = vadd.f32 %v654, 0.0001
        %v656 = vrsqrt.pop %v655
        %v657 = vmul.f32 %v655, %v656
        %vm658 = vcmp.eq.f32.partialorder %v655, inf
        %v659 = vsel %vm658, %v655, %v657
        %vm660 = vcmp.eq.f32.partialorder %v655, 0.0
        %v661 = vand.u32 %v655, 2147483648
        %v662 = vsel %vm660, %v661, %v659
        %v663 = vsub.f32 %v662, 0.01
        %665 = vrot.lane.b32.xlu0 %v663, 112
        %v666 = vpop.permute.xlu0 %665
        %s668 = scalar_lea.vmem %s234, 160 [#allocation8]
        %669 = vst.msk [vmem:[%s668] sm:$0xff] %vm587, %v666
        %v670 = vsub.f32 %v561, %v582
        %671 = vrot.lane.b32.xlu0 %v564, 8
        %v672 = vpop.permute.xlu0 %671
        %v674 = vadd.f32 %v561, %v672
        %v675 = vmul.f32 %v670, %v670
        %v676 = vmul.f32 %v674, %v674
        %678 = vrot.lane.b32.xlu0 %v676, 120
        %v679 = vpop.permute.xlu0 %678
        %v681 = vadd.f32 %v675, %v679
        %v682 = vmul.f32 %v681, 1.5943877e-08
        %v683 = vadd.f32 %v682, 0.0001
        %v684 = vrsqrt.pop %v683
        %v685 = vmul.f32 %v683, %v684
        %vm686 = vcmp.eq.f32.partialorder %v683, inf
        %v687 = vsel %vm686, %v683, %v685
        %vm688 = vcmp.eq.f32.partialorder %v683, 0.0
        %v689 = vand.u32 %v683, 2147483648
        %v690 = vsel %vm688, %v689, %v687
        %v691 = vsub.f32 %v690, 0.01
        %693 = vrot.lane.b32.xlu0 %v691, 112
        %v694 = vpop.permute.xlu0 %693
        %s696 = scalar_lea.vmem %s234, 96 [#allocation8]
        %697 = vst.msk [vmem:[%s696] sm:$0xff] %vm587, %v694
        %v698 = vadd.f32 %v561, %v582
        %v699 = vsub.f32 %v561, %v672
        %v700 = vmul.f32 %v698, %v698
        %v701 = vmul.f32 %v699, %v699
        %703 = vrot.lane.b32.xlu0 %v701, 120
        %v704 = vpop.permute.xlu0 %703
        %v706 = vadd.f32 %v700, %v704
        %v707 = vmul.f32 %v706, 1.5943877e-08
        %v708 = vadd.f32 %v707, 0.0001
        %v709 = vrsqrt.pop %v708
        %v710 = vmul.f32 %v708, %v709
        %vm711 = vcmp.eq.f32.partialorder %v708, inf
        %v712 = vsel %vm711, %v708, %v710
        %vm713 = vcmp.eq.f32.partialorder %v708, 0.0
        %v714 = vand.u32 %v708, 2147483648
        %v715 = vsel %vm713, %v714, %v712
        %v716 = vsub.f32 %v715, 0.01
        %718 = vrot.lane.b32.xlu0 %v716, 112
        %v719 = vpop.permute.xlu0 %718
        %s721 = scalar_lea.vmem %s234, 128 [#allocation8]
        %722 = vst.msk [vmem:[%s721] sm:$0xff] %vm587, %v719
        %723 = vmatprep.subr.bf16.mxu0 0
        %724 = vmatpush1.bf16.msra.mxu0 %v458
        %725 = vmatprep.subr.bf16.mxu0 0
        %726 = vmatpush1.bf16.msra.mxu0 0
        %727 = vmatprep.subr.bf16.mxu0 0
        %728 = vmatpush1.bf16.msra.mxu0 0
        %729 = vmatprep.subr.bf16.mxu0 0
        %730 = vmatpush1.bf16.msra.mxu0 0
        %731 = vmatprep.subr.bf16.mxu0 0
        %732 = vmatpush1.bf16.msra.mxu0 0
        %733 = vmatprep.subr.bf16.mxu0 0
        %734 = vmatpush1.bf16.msra.mxu0 0
        %735 = vmatprep.subr.bf16.mxu0 0
        %736 = vmatpush1.bf16.msra.mxu0 0
        %737 = vmatprep.subr.bf16.mxu0 0
        %738 = vmatpush1.bf16.msra.mxu0 0
        %739 = vmatprep.subr.bf16.mxu0 0
        %740 = vmatpush1.bf16.msra.mxu0 0
        %741 = vmatprep.subr.bf16.mxu0 0
        %742 = vmatpush1.bf16.msra.mxu0 0
        %743 = vmatprep.subr.bf16.mxu0 0
        %744 = vmatpush1.bf16.msra.mxu0 0
        %745 = vmatprep.subr.bf16.mxu0 0
        %746 = vmatpush1.bf16.msra.mxu0 0
        %747 = vmatprep.subr.bf16.mxu0 0
        %748 = vmatpush1.bf16.msra.mxu0 0
        %749 = vmatprep.subr.bf16.mxu0 0
        %750 = vmatpush1.bf16.msra.mxu0 0
        %751 = vmatprep.subr.bf16.mxu0 0
        %752 = vmatpush1.bf16.msra.mxu0 0
        %753 = vmatprep.subr.bf16.mxu0 0
        %754 = vmatpush1.bf16.msra.mxu0 0
        %755 = vmatprep.mubr.bf16.mxu0 0
        %756 = vmatmul.mubr.bf16.gmra.mrb[0].mxu0 %v472
        %v757 = vpop.f32.mrb[0].mxu0
        %v758 = vadd.f32 0.0, %v757
        %v759 = vpop.f32.mrb[0].mxu0
        %v760 = vpop.f32.mrb[0].mxu0
        %v761 = vadd.f32 0.0, %v760
        %v762 = vpop.f32.mrb[0].mxu0
        %763 = vmatprep.mubr.bf16.mxu0 0
        %764 = vmatmul.mubr.bf16.gmra.mrb[0].mxu0 %v475
        %v765 = vpop.f32.mrb[0].mxu0
        %v766 = vadd.f32 0.0, %v765
        %v767 = vpop.f32.mrb[0].mxu0
        %v768 = vpop.f32.mrb[0].mxu0
        %v769 = vadd.f32 0.0, %v768
        %v770 = vpop.f32.mrb[0].mxu0
        %771 = vdwg.mxu0
        %772 = vmatprep.subr.bf16.mxu0 0
        %773 = vmatpush1.bf16.msra.mxu0 %v438
        %774 = vmatprep.subr.bf16.mxu0 0
        %775 = vmatpush1.bf16.msra.mxu0 0
        %776 = vmatprep.subr.bf16.mxu0 0
        %777 = vmatpush1.bf16.msra.mxu0 0
        %778 = vmatprep.subr.bf16.mxu0 0
        %779 = vmatpush1.bf16.msra.mxu0 0
        %780 = vmatprep.subr.bf16.mxu0 0
        %781 = vmatpush1.bf16.msra.mxu0 0
        %782 = vmatprep.subr.bf16.mxu0 0
        %783 = vmatpush1.bf16.msra.mxu0 0
        %784 = vmatprep.subr.bf16.mxu0 0
        %785 = vmatpush1.bf16.msra.mxu0 0
        %786 = vmatprep.subr.bf16.mxu0 0
        %787 = vmatpush1.bf16.msra.mxu0 0
        %788 = vmatprep.subr.bf16.mxu0 0
        %789 = vmatpush1.bf16.msra.mxu0 0
        %790 = vmatprep.subr.bf16.mxu0 0
        %791 = vmatpush1.bf16.msra.mxu0 0
        %792 = vmatprep.subr.bf16.mxu0 0
        %793 = vmatpush1.bf16.msra.mxu0 0
        %794 = vmatprep.subr.bf16.mxu0 0
        %795 = vmatpush1.bf16.msra.mxu0 0
        %796 = vmatprep.subr.bf16.mxu0 0
        %797 = vmatpush1.bf16.msra.mxu0 0
        %798 = vmatprep.subr.bf16.mxu0 0
        %799 = vmatpush1.bf16.msra.mxu0 0
        %800 = vmatprep.subr.bf16.mxu0 0
        %801 = vmatpush1.bf16.msra.mxu0 0
        %802 = vmatprep.subr.bf16.mxu0 0
        %803 = vmatpush1.bf16.msra.mxu0 0
        %804 = vmatprep.mubr.bf16.mxu0 0
        %805 = vmatmul.mubr.bf16.gmra.mrb[0].mxu0 %v472
        %v806 = vpop.f32.mrb[0].mxu0
        %v807 = vadd.f32 %v758, %v806
        %v808 = vpop.f32.mrb[0].mxu0
        %v809 = vpop.f32.mrb[0].mxu0
        %v810 = vadd.f32 %v761, %v809
        %v811 = vpop.f32.mrb[0].mxu0
        %812 = vmatprep.mubr.bf16.mxu0 0
        %813 = vmatmul.mubr.bf16.gmra.mrb[0].mxu0 %v475
        %v814 = vpop.f32.mrb[0].mxu0
        %v815 = vadd.f32 %v766, %v814
        %v816 = vpop.f32.mrb[0].mxu0
        %v817 = vpop.f32.mrb[0].mxu0
        %v818 = vadd.f32 %v769, %v817
        %v819 = vpop.f32.mrb[0].mxu0
        %820 = vdwg.mxu0
        %822 = vrot.lane.b32.xlu0 %v807, 120
        %v823 = vpop.permute.xlu0 %822
        %v825 = vadd.f32 %v807, %v823
        %827 = vrot.lane.b32.xlu0 %v810, 120
        %v828 = vpop.permute.xlu0 %827
        %v830 = vadd.f32 %v810, %v828
        %v831 = vadd.f32 %v825, %v830
        %v832 = vmul.f32 %v831, 0.000625
        %s833 = scalar_lea.vmem %s234, 8 [#allocation8]
        %834 = vst.msk [vmem:[%s833] sm:$0xff] %vm587, %v832
        %836 = vrot.lane.b32.xlu0 %v818, 120
        %v837 = vpop.permute.xlu0 %836
        %v839 = vsub.f32 %v815, %v837
        %840 = vrot.lane.b32.xlu0 %v818, 8
        %v841 = vpop.permute.xlu0 %840
        %v843 = vadd.f32 %v815, %v841
        %v844 = vmul.f32 %v839, %v839
        %v845 = vmul.f32 %v843, %v843
        %847 = vrot.lane.b32.xlu0 %v845, 120
        %v848 = vpop.permute.xlu0 %847
        %v850 = vadd.f32 %v844, %v848
        %v851 = vmul.f32 %v850, 1.5943877e-08
        %v852 = vadd.f32 %v851, 0.0001
        %v853 = vrsqrt.pop %v852
        %v854 = vmul.f32 %v852, %v853
        %vm855 = vcmp.eq.f32.partialorder %v852, inf
        %v856 = vsel %vm855, %v852, %v854
        %vm857 = vcmp.eq.f32.partialorder %v852, 0.0
        %v858 = vand.u32 %v852, 2147483648
        %v859 = vsel %vm857, %v858, %v856
        %v860 = vsub.f32 %v859, 0.01
        %s861 = scalar_lea.vmem %s234, 40 [#allocation8]
        %862 = vst.msk [vmem:[%s861] sm:$0xff] %vm587, %v860
        %v863 = vadd.f32 %v815, %v837
        %v864 = vsub.f32 %v815, %v841
        %v865 = vmul.f32 %v863, %v863
        %v866 = vmul.f32 %v864, %v864
        %868 = vrot.lane.b32.xlu0 %v866, 120
        %v869 = vpop.permute.xlu0 %868
        %v871 = vadd.f32 %v865, %v869
        %v872 = vmul.f32 %v871, 1.5943877e-08
        %v873 = vadd.f32 %v872, 0.0001
        %v874 = vrsqrt.pop %v873
        %v875 = vmul.f32 %v873, %v874
        %vm876 = vcmp.eq.f32.partialorder %v873, inf
        %v877 = vsel %vm876, %v873, %v875
        %vm878 = vcmp.eq.f32.partialorder %v873, 0.0
        %v879 = vand.u32 %v873, 2147483648
        %v880 = vsel %vm878, %v879, %v877
        %v881 = vsub.f32 %v880, 0.01
        %s882 = scalar_lea.vmem %s234, 200 [#allocation8]
        %883 = vst.msk [vmem:[%s882] sm:$0xff] %vm587, %v881
        %v884 = vmul.f32 %v850, 8.134631e-11
        %v885 = vadd.f32 %v884, 0.0001
        %v886 = vrsqrt.pop %v885
        %v887 = vmul.f32 %v885, %v886
        %vm888 = vcmp.eq.f32.partialorder %v885, inf
        %v889 = vsel %vm888, %v885, %v887
        %vm890 = vcmp.eq.f32.partialorder %v885, 0.0
        %v891 = vand.u32 %v885, 2147483648
        %v892 = vsel %vm890, %v891, %v889
        %v893 = vsub.f32 %v892, 0.01
        %895 = vrot.lane.b32.xlu0 %v893, 112
        %v896 = vpop.permute.xlu0 %895
        %s898 = scalar_lea.vmem %s234, 72 [#allocation8]
        %899 = vst.msk [vmem:[%s898] sm:$0xff] %vm587, %v896
        %v900 = vmul.f32 %v871, 8.134631e-11
        %v901 = vadd.f32 %v900, 0.0001
        %v902 = vrsqrt.pop %v901
        %v903 = vmul.f32 %v901, %v902
        %vm904 = vcmp.eq.f32.partialorder %v901, inf
        %v905 = vsel %vm904, %v901, %v903
        %vm906 = vcmp.eq.f32.partialorder %v901, 0.0
        %v907 = vand.u32 %v901, 2147483648
        %v908 = vsel %vm906, %v907, %v905
        %v909 = vsub.f32 %v908, 0.01
        %911 = vrot.lane.b32.xlu0 %v909, 112
        %v912 = vpop.permute.xlu0 %911
        %s914 = scalar_lea.vmem %s234, 168 [#allocation8]
        %915 = vst.msk [vmem:[%s914] sm:$0xff] %vm587, %v912
        %v916 = vsub.f32 %v807, %v828
        %917 = vrot.lane.b32.xlu0 %v810, 8
        %v918 = vpop.permute.xlu0 %917
        %v920 = vadd.f32 %v807, %v918
        %v921 = vmul.f32 %v916, %v916
        %v922 = vmul.f32 %v920, %v920
        %924 = vrot.lane.b32.xlu0 %v922, 120
        %v925 = vpop.permute.xlu0 %924
        %v927 = vadd.f32 %v921, %v925
        %v928 = vmul.f32 %v927, 1.5943877e-08
        %v929 = vadd.f32 %v928, 0.0001
        %v930 = vrsqrt.pop %v929
        %v931 = vmul.f32 %v929, %v930
        %vm932 = vcmp.eq.f32.partialorder %v929, inf
        %v933 = vsel %vm932, %v929, %v931
        %vm934 = vcmp.eq.f32.partialorder %v929, 0.0
        %v935 = vand.u32 %v929, 2147483648
        %v936 = vsel %vm934, %v935, %v933
        %v937 = vsub.f32 %v936, 0.01
        %939 = vrot.lane.b32.xlu0 %v937, 112
        %v940 = vpop.permute.xlu0 %939
        %s942 = scalar_lea.vmem %s234, 104 [#allocation8]
        %943 = vst.msk [vmem:[%s942] sm:$0xff] %vm587, %v940
        %v944 = vadd.f32 %v807, %v828
        %v945 = vsub.f32 %v807, %v918
        %v946 = vmul.f32 %v944, %v944
        %v947 = vmul.f32 %v945, %v945
        %949 = vrot.lane.b32.xlu0 %v947, 120
        %v950 = vpop.permute.xlu0 %949
        %v952 = vadd.f32 %v946, %v950
        %v953 = vmul.f32 %v952, 1.5943877e-08
        %v954 = vadd.f32 %v953, 0.0001
        %v955 = vrsqrt.pop %v954
        %v956 = vmul.f32 %v954, %v955
        %vm957 = vcmp.eq.f32.partialorder %v954, inf
        %v958 = vsel %vm957, %v954, %v956
        %vm959 = vcmp.eq.f32.partialorder %v954, 0.0
        %v960 = vand.u32 %v954, 2147483648
        %v961 = vsel %vm959, %v960, %v958
        %v962 = vsub.f32 %v961, 0.01
        %964 = vrot.lane.b32.xlu0 %v962, 112
        %v965 = vpop.permute.xlu0 %964
        %s967 = scalar_lea.vmem %s234, 136 [#allocation8]
        %968 = vst.msk [vmem:[%s967] sm:$0xff] %vm587, %v965
        %969 = vmatprep.subr.bf16.mxu0 0
        %970 = vmatpush1.bf16.msra.mxu0 %v459
        %971 = vmatprep.subr.bf16.mxu0 0
        %972 = vmatpush1.bf16.msra.mxu0 0
        %973 = vmatprep.subr.bf16.mxu0 0
        %974 = vmatpush1.bf16.msra.mxu0 0
        %975 = vmatprep.subr.bf16.mxu0 0
        %976 = vmatpush1.bf16.msra.mxu0 0
        %977 = vmatprep.subr.bf16.mxu0 0
        %978 = vmatpush1.bf16.msra.mxu0 0
        %979 = vmatprep.subr.bf16.mxu0 0
        %980 = vmatpush1.bf16.msra.mxu0 0
        %981 = vmatprep.subr.bf16.mxu0 0
        %982 = vmatpush1.bf16.msra.mxu0 0
        %983 = vmatprep.subr.bf16.mxu0 0
        %984 = vmatpush1.bf16.msra.mxu0 0
        %985 = vmatprep.subr.bf16.mxu0 0
        %986 = vmatpush1.bf16.msra.mxu0 0
        %987 = vmatprep.subr.bf16.mxu0 0
        %988 = vmatpush1.bf16.msra.mxu0 0
        %989 = vmatprep.subr.bf16.mxu0 0
        %990 = vmatpush1.bf16.msra.mxu0 0
        %991 = vmatprep.subr.bf16.mxu0 0
        %992 = vmatpush1.bf16.msra.mxu0 0
        %993 = vmatprep.subr.bf16.mxu0 0
        %994 = vmatpush1.bf16.msra.mxu0 0
        %995 = vmatprep.subr.bf16.mxu0 0
        %996 = vmatpush1.bf16.msra.mxu0 0
        %997 = vmatprep.subr.bf16.mxu0 0
        %998 = vmatpush1.bf16.msra.mxu0 0
        %999 = vmatprep.subr.bf16.mxu0 0
        %1000 = vmatpush1.bf16.msra.mxu0 0
        %1001 = vmatprep.mubr.bf16.mxu0 0
        %1002 = vmatmul.mubr.bf16.gmra.mrb[0].mxu0 %v472
        %v1003 = vpop.f32.mrb[0].mxu0
        %v1004 = vadd.f32 0.0, %v1003
        %v1005 = vpop.f32.mrb[0].mxu0
        %v1006 = vpop.f32.mrb[0].mxu0
        %v1007 = vadd.f32 0.0, %v1006
        %v1008 = vpop.f32.mrb[0].mxu0
        %1009 = vmatprep.mubr.bf16.mxu0 0
        %1010 = vmatmul.mubr.bf16.gmra.mrb[0].mxu0 %v475
        %v1011 = vpop.f32.mrb[0].mxu0
        %v1012 = vadd.f32 0.0, %v1011
        %v1013 = vpop.f32.mrb[0].mxu0
        %v1014 = vpop.f32.mrb[0].mxu0
        %v1015 = vadd.f32 0.0, %v1014
        %v1016 = vpop.f32.mrb[0].mxu0
        %1017 = vdwg.mxu0
        %1018 = vmatprep.subr.bf16.mxu0 0
        %1019 = vmatpush1.bf16.msra.mxu0 %v439
        %1020 = vmatprep.subr.bf16.mxu0 0
        %1021 = vmatpush1.bf16.msra.mxu0 0
        %1022 = vmatprep.subr.bf16.mxu0 0
        %1023 = vmatpush1.bf16.msra.mxu0 0
        %1024 = vmatprep.subr.bf16.mxu0 0
        %1025 = vmatpush1.bf16.msra.mxu0 0
        %1026 = vmatprep.subr.bf16.mxu0 0
        %1027 = vmatpush1.bf16.msra.mxu0 0
        %1028 = vmatprep.subr.bf16.mxu0 0
        %1029 = vmatpush1.bf16.msra.mxu0 0
        %1030 = vmatprep.subr.bf16.mxu0 0
        %1031 = vmatpush1.bf16.msra.mxu0 0
        %1032 = vmatprep.subr.bf16.mxu0 0
        %1033 = vmatpush1.bf16.msra.mxu0 0
        %1034 = vmatprep.subr.bf16.mxu0 0
        %1035 = vmatpush1.bf16.msra.mxu0 0
        %1036 = vmatprep.subr.bf16.mxu0 0
        %1037 = vmatpush1.bf16.msra.mxu0 0
        %1038 = vmatprep.subr.bf16.mxu0 0
        %1039 = vmatpush1.bf16.msra.mxu0 0
        %1040 = vmatprep.subr.bf16.mxu0 0
        %1041 = vmatpush1.bf16.msra.mxu0 0
        %1042 = vmatprep.subr.bf16.mxu0 0
        %1043 = vmatpush1.bf16.msra.mxu0 0
        %1044 = vmatprep.subr.bf16.mxu0 0
        %1045 = vmatpush1.bf16.msra.mxu0 0
        %1046 = vmatprep.subr.bf16.mxu0 0
        %1047 = vmatpush1.bf16.msra.mxu0 0
        %1048 = vmatprep.subr.bf16.mxu0 0
        %1049 = vmatpush1.bf16.msra.mxu0 0
        %1050 = vmatprep.mubr.bf16.mxu0 0
        %1051 = vmatmul.mubr.bf16.gmra.mrb[0].mxu0 %v472
        %v1052 = vpop.f32.mrb[0].mxu0
        %v1053 = vadd.f32 %v1004, %v1052
        %v1054 = vpop.f32.mrb[0].mxu0
        %v1055 = vpop.f32.mrb[0].mxu0
        %v1056 = vadd.f32 %v1007, %v1055
        %v1057 = vpop.f32.mrb[0].mxu0
        %1058 = vmatprep.mubr.bf16.mxu0 0
        %1059 = vmatmul.mubr.bf16.gmra.mrb[0].mxu0 %v475
        %v1060 = vpop.f32.mrb[0].mxu0
        %v1061 = vadd.f32 %v1012, %v1060
        %v1062 = vpop.f32.mrb[0].mxu0
        %v1063 = vpop.f32.mrb[0].mxu0
        %v1064 = vadd.f32 %v1015, %v1063
        %v1065 = vpop.f32.mrb[0].mxu0
        %1066 = vdwg.mxu0
        %1068 = vrot.lane.b32.xlu0 %v1053, 120
        %v1069 = vpop.permute.xlu0 %1068
        %v1071 = vadd.f32 %v1053, %v1069
        %1073 = vrot.lane.b32.xlu0 %v1056, 120
        %v1074 = vpop.permute.xlu0 %1073
        %v1076 = vadd.f32 %v1056, %v1074
        %v1077 = vadd.f32 %v1071, %v1076
        %v1078 = vmul.f32 %v1077, 0.000625
        %s1079 = scalar_lea.vmem %s234, 16 [#allocation8]
        %1080 = vst.msk [vmem:[%s1079] sm:$0xff] %vm587, %v1078
        %1082 = vrot.lane.b32.xlu0 %v1064, 120
        %v1083 = vpop.permute.xlu0 %1082
        %v1085 = vsub.f32 %v1061, %v1083
        %1086 = vrot.lane.b32.xlu0 %v1064, 8
        %v1087 = vpop.permute.xlu0 %1086
        %v1089 = vadd.f32 %v1061, %v1087
        %v1090 = vmul.f32 %v1085, %v1085
        %v1091 = vmul.f32 %v1089, %v1089
        %1093 = vrot.lane.b32.xlu0 %v1091, 120
        %v1094 = vpop.permute.xlu0 %1093
        %v1096 = vadd.f32 %v1090, %v1094
        %v1097 = vmul.f32 %v1096, 1.5943877e-08
        %v1098 = vadd.f32 %v1097, 0.0001
        %v1099 = vrsqrt.pop %v1098
        %v1100 = vmul.f32 %v1098, %v1099
        %vm1101 = vcmp.eq.f32.partialorder %v1098, inf
        %v1102 = vsel %vm1101, %v1098, %v1100
        %vm1103 = vcmp.eq.f32.partialorder %v1098, 0.0
        %v1104 = vand.u32 %v1098, 2147483648
        %v1105 = vsel %vm1103, %v1104, %v1102
        %v1106 = vsub.f32 %v1105, 0.01
        %s1107 = scalar_lea.vmem %s234, 48 [#allocation8]
        %1108 = vst.msk [vmem:[%s1107] sm:$0xff] %vm587, %v1106
        %v1109 = vadd.f32 %v1061, %v1083
        %v1110 = vsub.f32 %v1061, %v1087
        %v1111 = vmul.f32 %v1109, %v1109
        %v1112 = vmul.f32 %v1110, %v1110
        %1114 = vrot.lane.b32.xlu0 %v1112, 120
        %v1115 = vpop.permute.xlu0 %1114
        %v1117 = vadd.f32 %v1111, %v1115
        %v1118 = vmul.f32 %v1117, 1.5943877e-08
        %v1119 = vadd.f32 %v1118, 0.0001
        %v1120 = vrsqrt.pop %v1119
        %v1121 = vmul.f32 %v1119, %v1120
        %vm1122 = vcmp.eq.f32.partialorder %v1119, inf
        %v1123 = vsel %vm1122, %v1119, %v1121
        %vm1124 = vcmp.eq.f32.partialorder %v1119, 0.0
        %v1125 = vand.u32 %v1119, 2147483648
        %v1126 = vsel %vm1124, %v1125, %v1123
        %v1127 = vsub.f32 %v1126, 0.01
        %s1128 = scalar_lea.vmem %s234, 208 [#allocation8]
        %1129 = vst.msk [vmem:[%s1128] sm:$0xff] %vm587, %v1127
        %v1130 = vmul.f32 %v1096, 8.134631e-11
        %v1131 = vadd.f32 %v1130, 0.0001
        %v1132 = vrsqrt.pop %v1131
        %v1133 = vmul.f32 %v1131, %v1132
        %vm1134 = vcmp.eq.f32.partialorder %v1131, inf
        %v1135 = vsel %vm1134, %v1131, %v1133
        %vm1136 = vcmp.eq.f32.partialorder %v1131, 0.0
        %v1137 = vand.u32 %v1131, 2147483648
        %v1138 = vsel %vm1136, %v1137, %v1135
        %v1139 = vsub.f32 %v1138, 0.01
        %1141 = vrot.lane.b32.xlu0 %v1139, 112
        %v1142 = vpop.permute.xlu0 %1141
        %s1144 = scalar_lea.vmem %s234, 80 [#allocation8]
        %1145 = vst.msk [vmem:[%s1144] sm:$0xff] %vm587, %v1142
        %v1146 = vmul.f32 %v1117, 8.134631e-11
        %v1147 = vadd.f32 %v1146, 0.0001
        %v1148 = vrsqrt.pop %v1147
        %v1149 = vmul.f32 %v1147, %v1148
        %vm1150 = vcmp.eq.f32.partialorder %v1147, inf
        %v1151 = vsel %vm1150, %v1147, %v1149
        %vm1152 = vcmp.eq.f32.partialorder %v1147, 0.0
        %v1153 = vand.u32 %v1147, 2147483648
        %v1154 = vsel %vm1152, %v1153, %v1151
        %v1155 = vsub.f32 %v1154, 0.01
        %1157 = vrot.lane.b32.xlu0 %v1155, 112
        %v1158 = vpop.permute.xlu0 %1157
        %s1160 = scalar_lea.vmem %s234, 176 [#allocation8]
        %1161 = vst.msk [vmem:[%s1160] sm:$0xff] %vm587, %v1158
        %v1162 = vsub.f32 %v1053, %v1074
        %1163 = vrot.lane.b32.xlu0 %v1056, 8
        %v1164 = vpop.permute.xlu0 %1163
        %v1166 = vadd.f32 %v1053, %v1164
        %v1167 = vmul.f32 %v1162, %v1162
        %v1168 = vmul.f32 %v1166, %v1166
        %1170 = vrot.lane.b32.xlu0 %v1168, 120
        %v1171 = vpop.permute.xlu0 %1170
        %v1173 = vadd.f32 %v1167, %v1171
        %v1174 = vmul.f32 %v1173, 1.5943877e-08
        %v1175 = vadd.f32 %v1174, 0.0001
        %v1176 = vrsqrt.pop %v1175
        %v1177 = vmul.f32 %v1175, %v1176
        %vm1178 = vcmp.eq.f32.partialorder %v1175, inf
        %v1179 = vsel %vm1178, %v1175, %v1177
        %vm1180 = vcmp.eq.f32.partialorder %v1175, 0.0
        %v1181 = vand.u32 %v1175, 2147483648
        %v1182 = vsel %vm1180, %v1181, %v1179
        %v1183 = vsub.f32 %v1182, 0.01
        %1185 = vrot.lane.b32.xlu0 %v1183, 112
        %v1186 = vpop.permute.xlu0 %1185
        %s1188 = scalar_lea.vmem %s234, 112 [#allocation8]
        %1189 = vst.msk [vmem:[%s1188] sm:$0xff] %vm587, %v1186
        %v1190 = vadd.f32 %v1053, %v1074
        %v1191 = vsub.f32 %v1053, %v1164
        %v1192 = vmul.f32 %v1190, %v1190
        %v1193 = vmul.f32 %v1191, %v1191
        %1195 = vrot.lane.b32.xlu0 %v1193, 120
        %v1196 = vpop.permute.xlu0 %1195
        %v1198 = vadd.f32 %v1192, %v1196
        %v1199 = vmul.f32 %v1198, 1.5943877e-08
        %v1200 = vadd.f32 %v1199, 0.0001
        %v1201 = vrsqrt.pop %v1200
        %v1202 = vmul.f32 %v1200, %v1201
        %vm1203 = vcmp.eq.f32.partialorder %v1200, inf
        %v1204 = vsel %vm1203, %v1200, %v1202
        %vm1205 = vcmp.eq.f32.partialorder %v1200, 0.0
        %v1206 = vand.u32 %v1200, 2147483648
        %v1207 = vsel %vm1205, %v1206, %v1204
        %v1208 = vsub.f32 %v1207, 0.01
        %1210 = vrot.lane.b32.xlu0 %v1208, 112
        %v1211 = vpop.permute.xlu0 %1210
        %s1213 = scalar_lea.vmem %s234, 144 [#allocation8]
        %1214 = vst.msk [vmem:[%s1213] sm:$0xff] %vm587, %v1211
        %1215 = vmatprep.subr.bf16.mxu0 0
        %1216 = vmatpush1.bf16.msra.mxu0 %v460
        %1217 = vmatprep.subr.bf16.mxu0 0
        %1218 = vmatpush1.bf16.msra.mxu0 0
        %1219 = vmatprep.subr.bf16.mxu0 0
        %1220 = vmatpush1.bf16.msra.mxu0 0
        %1221 = vmatprep.subr.bf16.mxu0 0
        %1222 = vmatpush1.bf16.msra.mxu0 0
        %1223 = vmatprep.subr.bf16.mxu0 0
        %1224 = vmatpush1.bf16.msra.mxu0 0
        %1225 = vmatprep.subr.bf16.mxu0 0
        %1226 = vmatpush1.bf16.msra.mxu0 0
        %1227 = vmatprep.subr.bf16.mxu0 0
        %1228 = vmatpush1.bf16.msra.mxu0 0
        %1229 = vmatprep.subr.bf16.mxu0 0
        %1230 = vmatpush1.bf16.msra.mxu0 0
        %1231 = vmatprep.subr.bf16.mxu0 0
        %1232 = vmatpush1.bf16.msra.mxu0 0
        %1233 = vmatprep.subr.bf16.mxu0 0
        %1234 = vmatpush1.bf16.msra.mxu0 0
        %1235 = vmatprep.subr.bf16.mxu0 0
        %1236 = vmatpush1.bf16.msra.mxu0 0
        %1237 = vmatprep.subr.bf16.mxu0 0
        %1238 = vmatpush1.bf16.msra.mxu0 0
        %1239 = vmatprep.subr.bf16.mxu0 0
        %1240 = vmatpush1.bf16.msra.mxu0 0
        %1241 = vmatprep.subr.bf16.mxu0 0
        %1242 = vmatpush1.bf16.msra.mxu0 0
        %1243 = vmatprep.subr.bf16.mxu0 0
        %1244 = vmatpush1.bf16.msra.mxu0 0
        %1245 = vmatprep.subr.bf16.mxu0 0
        %1246 = vmatpush1.bf16.msra.mxu0 0
        %1247 = vmatprep.mubr.bf16.mxu0 0
        %1248 = vmatmul.mubr.bf16.gmra.mrb[0].mxu0 %v472
        %v1249 = vpop.f32.mrb[0].mxu0
        %v1250 = vadd.f32 0.0, %v1249
        %v1251 = vpop.f32.mrb[0].mxu0
        %v1252 = vpop.f32.mrb[0].mxu0
        %v1253 = vadd.f32 0.0, %v1252
        %v1254 = vpop.f32.mrb[0].mxu0
        %1255 = vmatprep.mubr.bf16.mxu0 0
        %1256 = vmatmul.mubr.bf16.gmra.mrb[0].mxu0 %v475
        %v1257 = vpop.f32.mrb[0].mxu0
        %v1258 = vadd.f32 0.0, %v1257
        %v1259 = vpop.f32.mrb[0].mxu0
        %v1260 = vpop.f32.mrb[0].mxu0
        %v1261 = vadd.f32 0.0, %v1260
        %v1262 = vpop.f32.mrb[0].mxu0
        %1263 = vdwg.mxu0
        %1264 = vmatprep.subr.bf16.mxu0 0
        %1265 = vmatpush1.bf16.msra.mxu0 %v440
        %1266 = vmatprep.subr.bf16.mxu0 0
        %1267 = vmatpush1.bf16.msra.mxu0 0
        %1268 = vmatprep.subr.bf16.mxu0 0
        %1269 = vmatpush1.bf16.msra.mxu0 0
        %1270 = vmatprep.subr.bf16.mxu0 0
        %1271 = vmatpush1.bf16.msra.mxu0 0
        %1272 = vmatprep.subr.bf16.mxu0 0
        %1273 = vmatpush1.bf16.msra.mxu0 0
        %1274 = vmatprep.subr.bf16.mxu0 0
        %1275 = vmatpush1.bf16.msra.mxu0 0
        %1276 = vmatprep.subr.bf16.mxu0 0
        %1277 = vmatpush1.bf16.msra.mxu0 0
        %1278 = vmatprep.subr.bf16.mxu0 0
        %1279 = vmatpush1.bf16.msra.mxu0 0
        %1280 = vmatprep.subr.bf16.mxu0 0
        %1281 = vmatpush1.bf16.msra.mxu0 0
        %1282 = vmatprep.subr.bf16.mxu0 0
        %1283 = vmatpush1.bf16.msra.mxu0 0
        %1284 = vmatprep.subr.bf16.mxu0 0
        %1285 = vmatpush1.bf16.msra.mxu0 0
        %1286 = vmatprep.subr.bf16.mxu0 0
        %1287 = vmatpush1.bf16.msra.mxu0 0
        %1288 = vmatprep.subr.bf16.mxu0 0
        %1289 = vmatpush1.bf16.msra.mxu0 0
        %1290 = vmatprep.subr.bf16.mxu0 0
        %1291 = vmatpush1.bf16.msra.mxu0 0
        %1292 = vmatprep.subr.bf16.mxu0 0
        %1293 = vmatpush1.bf16.msra.mxu0 0
        %1294 = vmatprep.subr.bf16.mxu0 0
        %1295 = vmatpush1.bf16.msra.mxu0 0
        %1296 = vmatprep.mubr.bf16.mxu0 0
        %1297 = vmatmul.mubr.bf16.gmra.mrb[0].mxu0 %v472
        %v1298 = vpop.f32.mrb[0].mxu0
        %v1299 = vadd.f32 %v1250, %v1298
        %v1300 = vpop.f32.mrb[0].mxu0
        %v1301 = vpop.f32.mrb[0].mxu0
        %v1302 = vadd.f32 %v1253, %v1301
        %v1303 = vpop.f32.mrb[0].mxu0
        %1304 = vmatprep.mubr.bf16.mxu0 0
        %1305 = vmatmul.mubr.bf16.gmra.mrb[0].mxu0 %v475
        %v1306 = vpop.f32.mrb[0].mxu0
        %v1307 = vadd.f32 %v1258, %v1306
        %v1308 = vpop.f32.mrb[0].mxu0
        %v1309 = vpop.f32.mrb[0].mxu0
        %v1310 = vadd.f32 %v1261, %v1309
        %v1311 = vpop.f32.mrb[0].mxu0
        %1312 = vdwg.mxu0
        %1314 = vrot.lane.b32.xlu0 %v1299, 120
        %v1315 = vpop.permute.xlu0 %1314
        %v1317 = vadd.f32 %v1299, %v1315
        %1319 = vrot.lane.b32.xlu0 %v1302, 120
        %v1320 = vpop.permute.xlu0 %1319
        %v1322 = vadd.f32 %v1302, %v1320
        %v1323 = vadd.f32 %v1317, %v1322
        %v1324 = vmul.f32 %v1323, 0.000625
        %s1325 = scalar_lea.vmem %s234, 24 [#allocation8]
        %1326 = vst.msk [vmem:[%s1325] sm:$0xff] %vm587, %v1324
        %1328 = vrot.lane.b32.xlu0 %v1310, 120
        %v1329 = vpop.permute.xlu0 %1328
        %v1331 = vsub.f32 %v1307, %v1329
        %1332 = vrot.lane.b32.xlu0 %v1310, 8
        %v1333 = vpop.permute.xlu0 %1332
        %v1335 = vadd.f32 %v1307, %v1333
        %v1336 = vmul.f32 %v1331, %v1331
        %v1337 = vmul.f32 %v1335, %v1335
        %1339 = vrot.lane.b32.xlu0 %v1337, 120
        %v1340 = vpop.permute.xlu0 %1339
        %v1342 = vadd.f32 %v1336, %v1340
        %v1343 = vmul.f32 %v1342, 1.5943877e-08
        %v1344 = vadd.f32 %v1343, 0.0001
        %v1345 = vrsqrt.pop %v1344
        %v1346 = vmul.f32 %v1344, %v1345
        %vm1347 = vcmp.eq.f32.partialorder %v1344, inf
        %v1348 = vsel %vm1347, %v1344, %v1346
        %vm1349 = vcmp.eq.f32.partialorder %v1344, 0.0
        %v1350 = vand.u32 %v1344, 2147483648
        %v1351 = vsel %vm1349, %v1350, %v1348
        %v1352 = vsub.f32 %v1351, 0.01
        %s1353 = scalar_lea.vmem %s234, 56 [#allocation8]
        %1354 = vst.msk [vmem:[%s1353] sm:$0xff] %vm587, %v1352
        %v1355 = vadd.f32 %v1307, %v1329
        %v1356 = vsub.f32 %v1307, %v1333
        %v1357 = vmul.f32 %v1355, %v1355
        %v1358 = vmul.f32 %v1356, %v1356
        %1360 = vrot.lane.b32.xlu0 %v1358, 120
        %v1361 = vpop.permute.xlu0 %1360
        %v1363 = vadd.f32 %v1357, %v1361
        %v1364 = vmul.f32 %v1363, 1.5943877e-08
        %v1365 = vadd.f32 %v1364, 0.0001
        %v1366 = vrsqrt.pop %v1365
        %v1367 = vmul.f32 %v1365, %v1366
        %vm1368 = vcmp.eq.f32.partialorder %v1365, inf
        %v1369 = vsel %vm1368, %v1365, %v1367
        %vm1370 = vcmp.eq.f32.partialorder %v1365, 0.0
        %v1371 = vand.u32 %v1365, 2147483648
        %v1372 = vsel %vm1370, %v1371, %v1369
        %v1373 = vsub.f32 %v1372, 0.01
        %s1374 = scalar_lea.vmem %s234, 216 [#allocation8]
        %1375 = vst.msk [vmem:[%s1374] sm:$0xff] %vm587, %v1373
        %v1376 = vmul.f32 %v1342, 8.134631e-11
        %v1377 = vadd.f32 %v1376, 0.0001
        %v1378 = vrsqrt.pop %v1377
        %v1379 = vmul.f32 %v1377, %v1378
        %vm1380 = vcmp.eq.f32.partialorder %v1377, inf
        %v1381 = vsel %vm1380, %v1377, %v1379
        %vm1382 = vcmp.eq.f32.partialorder %v1377, 0.0
        %v1383 = vand.u32 %v1377, 2147483648
        %v1384 = vsel %vm1382, %v1383, %v1381
        %v1385 = vsub.f32 %v1384, 0.01
        %1387 = vrot.lane.b32.xlu0 %v1385, 112
        %v1388 = vpop.permute.xlu0 %1387
        %s1390 = scalar_lea.vmem %s234, 88 [#allocation8]
        %1391 = vst.msk [vmem:[%s1390] sm:$0xff] %vm587, %v1388
        %v1392 = vmul.f32 %v1363, 8.134631e-11
        %v1393 = vadd.f32 %v1392, 0.0001
        %v1394 = vrsqrt.pop %v1393
        %v1395 = vmul.f32 %v1393, %v1394
        %vm1396 = vcmp.eq.f32.partialorder %v1393, inf
        %v1397 = vsel %vm1396, %v1393, %v1395
        %vm1398 = vcmp.eq.f32.partialorder %v1393, 0.0
        %v1399 = vand.u32 %v1393, 2147483648
        %v1400 = vsel %vm1398, %v1399, %v1397
        %v1401 = vsub.f32 %v1400, 0.01
        %1403 = vrot.lane.b32.xlu0 %v1401, 112
        %v1404 = vpop.permute.xlu0 %1403
        %s1406 = scalar_lea.vmem %s234, 184 [#allocation8]
        %1407 = vst.msk [vmem:[%s1406] sm:$0xff] %vm587, %v1404
        %v1408 = vsub.f32 %v1299, %v1320
        %1409 = vrot.lane.b32.xlu0 %v1302, 8
        %v1410 = vpop.permute.xlu0 %1409
        %v1412 = vadd.f32 %v1299, %v1410
        %v1413 = vmul.f32 %v1408, %v1408
        %v1414 = vmul.f32 %v1412, %v1412
        %1416 = vrot.lane.b32.xlu0 %v1414, 120
        %v1417 = vpop.permute.xlu0 %1416
        %v1419 = vadd.f32 %v1413, %v1417
        %v1420 = vmul.f32 %v1419, 1.5943877e-08
        %v1421 = vadd.f32 %v1420, 0.0001
        %v1422 = vrsqrt.pop %v1421
        %v1423 = vmul.f32 %v1421, %v1422
        %vm1424 = vcmp.eq.f32.partialorder %v1421, inf
        %v1425 = vsel %vm1424, %v1421, %v1423
        %vm1426 = vcmp.eq.f32.partialorder %v1421, 0.0
        %v1427 = vand.u32 %v1421, 2147483648
        %v1428 = vsel %vm1426, %v1427, %v1425
        %v1429 = vsub.f32 %v1428, 0.01
        %1431 = vrot.lane.b32.xlu0 %v1429, 112
        %v1432 = vpop.permute.xlu0 %1431
        %s1434 = scalar_lea.vmem %s234, 120 [#allocation8]
        %1435 = vst.msk [vmem:[%s1434] sm:$0xff] %vm587, %v1432
        %v1436 = vadd.f32 %v1299, %v1320
        %v1437 = vsub.f32 %v1299, %v1410
        %v1438 = vmul.f32 %v1436, %v1436
        %v1439 = vmul.f32 %v1437, %v1437
        %1441 = vrot.lane.b32.xlu0 %v1439, 120
        %v1442 = vpop.permute.xlu0 %1441
        %v1444 = vadd.f32 %v1438, %v1442
        %v1445 = vmul.f32 %v1444, 1.5943877e-08
        %v1446 = vadd.f32 %v1445, 0.0001
        %v1447 = vrsqrt.pop %v1446
        %v1448 = vmul.f32 %v1446, %v1447
        %vm1449 = vcmp.eq.f32.partialorder %v1446, inf
        %v1450 = vsel %vm1449, %v1446, %v1448
        %vm1451 = vcmp.eq.f32.partialorder %v1446, 0.0
        %v1452 = vand.u32 %v1446, 2147483648
        %v1453 = vsel %vm1451, %v1452, %v1450
        %v1454 = vsub.f32 %v1453, 0.01
        %1456 = vrot.lane.b32.xlu0 %v1454, 112
        %v1457 = vpop.permute.xlu0 %1456
        %s1459 = scalar_lea.vmem %s234, 152 [#allocation8]
        %1460 = vst.msk [vmem:[%s1459] sm:$0xff] %vm587, %v1457
        %s1461 = sand.u32 %s111, 1
        %s1462 = scalar_lea.sflag [#allocation4], %s1461
        %s1463 = sand.u32 %s111, 1
        %s1464 = smul.addr %s1463, 224
        %s1465 = scalar_lea.vmem [#allocation8], %s1464
        // Predicated region
        $region45: #{tpu_custom_call.1} parent=31 // pred_check
          %p1466 = pneg %p121
        $region46: #{tpu_custom_call.1} parent=31 // pred_check_branch
          %1468 = sbr.rel (%p1466) target = $region48
        $region47: #{tpu_custom_call.1} parent=31 // pred_region
          %s1469 = smul.u32 4, %s24
          %s1471 = ssub.s32 3584, 3584
          %1472 = vsyncadd %s1462, %s1471
          %s1473 = smul.addr %s23, 28
          %s1474 = sadd.s32 %s1469, %s1473
          %s1475 = smul.addr %s1474, 128
          %s1476 = scalar_lea.hbm %s3, %s1475
          %s1477 = sshll.u32 %s1465, 4
          %s1478 = int_to_ptr.vmem [resolvable:$true] %s1477
          %1483 = dma.vmem_to_hbm [thread:$0]  %s1478, 3584, %s1476, %s1462, 128, 128, 8
        $region48: #{tpu_custom_call.1} parent=31 // pred_fallthru
          _
      $region32: #{tpu_custom_call.1} parent=5 // pred_fallthru
        _
      %p1484 = scmp.le.s32.totalorder 2, %s14
      // Predicated region
      $region49: #{tpu_custom_call.1} parent=5 // pred_check
        %p1485 = pneg %p1484
      $region50: #{tpu_custom_call.1} parent=5 // pred_check_branch
        %1487 = sbr.rel (%p1485) target = $region52
      $region51: #{tpu_custom_call.1} parent=5 // pred_region
        %s1488 = ssub.s32 %s14, 2
        // Predicated region
        $region53: #{tpu_custom_call.1} parent=51 // pred_check
          %p1489 = pneg %p127
        $region54: #{tpu_custom_call.1} parent=51 // pred_check_branch
          %1491 = sbr.rel (%p1489) target = $region56
        $region55: #{tpu_custom_call.1} parent=51 // pred_region
          %s1492 = sand.u32 %s112, 1
          %s1493 = scalar_lea.sflag [#allocation4], %s1492
          %s1494 = sand.u32 %s112, 1
          %s1495 = smul.addr %s1494, 224
          %s1496 = scalar_lea.vmem [#allocation8], %s1495
          %1497 = dma.done %s1493, 3584
        $region56: #{tpu_custom_call.1} parent=51 // pred_fallthru
          _
      $region52: #{tpu_custom_call.1} parent=5 // pred_fallthru
        _
    $region6: #{tpu_custom_call.1} parent=1 // loop_footer
      %s18 = sadd.s32 1, %s14
    $region7: #{tpu_custom_call.1} parent=1 // loop_footer_branch
      %13 = sbr.rel target = $region3
    $region8: #{tpu_custom_call.1} parent=1 // loop_exit
      _
    %1498 = vsyncpa [#allocation3], 1
    %s1499 = scalar_lea.sflag [#allocation3], 1
    %1500 = vsyncpa %s1499, 1
    %1501 = vsyncpa [#allocation6], 1
    %1502 = vsyncpa [#allocation4], 1
    %s1503 = scalar_lea.sflag [#allocation4], 1
    %1504 = vsyncpa %s1503, 1

</llo_original>
